<compile_context>
chip_gen: v6e
topology: v6e:2x2x1
jax: 0.10.0
libtpu: 0.0.40
codegen_flags: <defaults>
</compile_context>

<pallas_src>
import math

import jax
import jax.numpy as jnp
from jax import lax
from jax.experimental import pallas as pl
from jax.experimental.pallas import tpu as pltpu

# ---- static config (small synthetic sizes) ----
B = 2
P = 16               # number of points
K = 8                # num_neighbors
E = P * K            # edges per batch element (= 128 lanes, exactly one vreg row)
NODE_DIM = 8
OUT_DIM = 32
MSG_DIM = OUT_DIM            # message_dim defaults to out_dim
ENC_DIM = MSG_DIM // 2       # node_encode output channels
LV_FTS = 4                   # (lnkt, lnz, lndelta, lnm2) == edge_dim
SE_RED = 16
SE_MSG = MSG_DIM // SE_RED   # = 2
SE_OUT = OUT_DIM // SE_RED   # = 2
BN_EPS = 1e-5
EPS = 1e-8
PI = math.pi
TWO_PI = 2.0 * math.pi

NROWS = 24                   # packed per-batch node slab rows (8 feat + 8 phys + 1 mask + pad)

# weight-slab row offsets (bf16 slab, every block 16-row aligned, 32 lanes wide,
# each block stored TRANSPOSED: (Cout, Cin))
W_ENC, W_1C, W_1N, W_1L, W_E2 = 0, 16, 48, 80, 112
W_SE1, W_SE2, W_SA = 144, 160, 192
W_N1, W_N2, W_NS1, W_NS2, W_SC = 224, 256, 288, 304, 336
W_ROWS = 368

# per-channel column-vector slab (f32, (32, NV)); columns:
(V_ENC_S, V_ENC_B, V_E1S_C, V_E1B_C, V_E1S_N, V_E1B_N, V_E1S_L, V_E1B_L,
 V_E2S, V_E2B, V_SAS, V_SAB, V_N1S, V_N1B, V_N2S, V_N2B, V_GAMMA) = range(17)
NV = 17
VROWS = 32


def _delta_phi(a, b):
    # (a - b + pi) mod 2pi - pi  (floor-mod, matches torch "%" semantics)
    d = a - b + PI
    d = d - TWO_PI * jnp.floor(d * (1.0 / TWO_PI))
    return d - PI


# ---------------- the fused per-batch kernel ----------------
def _msec_kernel(node_ref, idx_ref, vc_ref, w_ref, out_ref):
    f32 = jnp.float32
    bf16 = jnp.bfloat16

    def col(i, c):                   # per-channel BN scale/shift as a (c, 1) column
        return vc_ref[0:c, i:i + 1]

    def wt(o, rows, cin):            # transposed weight block (Cout_rows, Cin_lanes), bf16
        return w_ref[o:o + rows, 0:cin]

    def dotf(w, x):                  # bf16 operands, f32 accumulation (MXU native)
        return jnp.dot(w, x.astype(bf16), preferred_element_type=f32)

    # ---- per-batch node inputs (channels-major) ----
    feat = node_ref[0:NODE_DIM, :]                   # (8, P) raw features
    physt = node_ref[NODE_DIM:NODE_DIM + 8, :]       # (8, P): px,py,pz,E,pt,rap,phi,0
    maskr = node_ref[16:17, :]                       # (1, P) in {0, 1}
    idx = idx_ref[...]                               # (1, E) int32 neighbour ids in [0, P)

    # ---- lane-dense one-hot maps (P, E): neighbour map + structural centre map ----
    nid = lax.broadcasted_iota(jnp.int32, (P, E), 0)
    eid = lax.broadcasted_iota(jnp.int32, (P, E), 1)
    lo = nid * K
    r_t = jnp.where((eid >= lo) & (eid < lo + K), 1.0, 0.0)    # centre of edge e is e // K
    g_t = jnp.where(nid == idx, 1.0, 0.0)                      # neighbour of edge e is idx[e]

    # ---- node_encode: BN -> ReLU -> 1x1 conv (tiny, channels-major) ----
    enc = dotf(wt(W_ENC, ENC_DIM, NODE_DIM),
               jnp.maximum(feat * col(V_ENC_S, NODE_DIM) + col(V_ENC_B, NODE_DIM), 0.0))

    # first edge conv split by input slice: centre / neighbour parts are per-node
    cc = dotf(wt(W_1C, MSG_DIM, ENC_DIM),
              jnp.maximum(enc * col(V_E1S_C, ENC_DIM) + col(V_E1B_C, ENC_DIM), 0.0))  # (M, P)
    cn = dotf(wt(W_1N, MSG_DIM, ENC_DIM),
              jnp.maximum(enc * col(V_E1S_N, ENC_DIM) + col(V_E1B_N, ENC_DIM), 0.0))  # (M, P)

    # ---- node -> edge maps via idle-MXU one-hot dots (N = 128 output lanes) ----
    ctr = jnp.dot(physt, r_t, preferred_element_type=f32)      # (8, E)
    ngb = jnp.dot(physt, g_t, preferred_element_type=f32)      # (8, E)
    cc_e = jnp.dot(cc, r_t, preferred_element_type=f32)        # (M, E)
    cn_e = jnp.dot(cn, g_t, preferred_element_type=f32)        # (M, E)
    m_ctr = jnp.dot(maskr, r_t, preferred_element_type=f32)    # (1, E)
    m_ngb = jnp.dot(maskr, g_t, preferred_element_type=f32)    # (1, E)
    valid = m_ctr * m_ngb                                      # (1, E) in {0, 1}

    # ---- pairwise_lv_fts: lnkt, lnz, lndelta, lnm2 (f32 physics prologue) ----
    pxi, pyi, pzi, ei = ctr[0:1], ctr[1:2], ctr[2:3], ctr[3:4]
    pti, rapi, phii = ctr[4:5], ctr[5:6], ctr[6:7]
    pxj, pyj, pzj, ej = ngb[0:1], ngb[1:2], ngb[2:3], ngb[3:4]
    ptj, rapj, phij = ngb[4:5], ngb[5:6], ngb[6:7]
    ptmin = jnp.minimum(pti, ptj)
    drap = rapi - rapj
    dphi = _delta_phi(phii, phij)
    delta = jnp.sqrt(drap * drap + dphi * dphi)
    lndelta = jnp.log(jnp.maximum(delta, EPS))
    lnkt = jnp.log(jnp.maximum(ptmin * delta, EPS))
    lnz = jnp.log(jnp.maximum(ptmin / jnp.maximum(pti + ptj, EPS), EPS))
    sx = pxi + pxj; sy = pyi + pyj; sz = pzi + pzj; s_e = ei + ej
    lnm2 = jnp.log(jnp.maximum(s_e * s_e - (sx * sx + sy * sy + sz * sz), EPS))
    lv = jnp.concatenate([lnkt, lnz, lndelta, lnm2], axis=0)   # (4, E)

    # ---- edge_mlp layer 1 (lv slice) + layer 2 ----
    h = cc_e + cn_e + dotf(wt(W_1L, MSG_DIM, LV_FTS),
                           jnp.maximum(lv * col(V_E1S_L, LV_FTS) + col(V_E1B_L, LV_FTS), 0.0))
    msg = dotf(wt(W_E2, MSG_DIM, MSG_DIM),
               jnp.maximum(h * col(V_E2S, MSG_DIM) + col(V_E2B, MSG_DIM), 0.0))       # (M, E)

    # ---- edge squeeze-and-excitation (masked mean over this batch element) ----
    n_e = jnp.maximum(jnp.sum(valid, axis=1, keepdims=True), 1.0)                     # (1, 1)
    y = jnp.sum(msg * valid, axis=1, keepdims=True) * pl.reciprocal(n_e, approx=True)  # (M, 1)
    y1 = jnp.maximum(dotf(wt(W_SE1, 16, MSG_DIM), y), 0.0)      # (16, 1), rows >= SE_MSG are 0
    gate = jax.nn.sigmoid(dotf(wt(W_SE2, MSG_DIM, 16), y1))     # (M, 1)
    msg = msg * gate

    # ---- attention aggregation over the K neighbours of each node ----
    a = jnp.maximum(msg * col(V_SAS, MSG_DIM) + col(V_SAB, MSG_DIM), 0.0)
    logits = dotf(wt(W_SA, MSG_DIM, MSG_DIM), a)                                      # (M, E)
    logits = jnp.where(valid > 0.0, logits, -1e9)               # masked_fill(null, -1e9)
    # shift-invariant softmax with a per-channel global max (overflow safe); the
    # per-group normalisation below makes it exact.
    cmax = jnp.max(logits, axis=1, keepdims=True)               # (M, 1)
    ex = jnp.exp(logits - cmax)                                 # (M, E), f32

    def segsum(x):          # sum over each node's K edges -> (M, P), idle-MXU reduce
        return lax.dot_general(x, r_t, (((1,), (1,)), ((), ())),
                               preferred_element_type=f32)

    num = segsum(ex * msg)                                       # (M, P)
    den = segsum(ex)                                             # (M, P)
    msum = segsum(msg)                                           # (M, P) (uniform-attn case)
    uni = den <= 0.0        # fully masked centre node -> torch gives uniform 1/K attention
    den_safe = jnp.where(uni, jnp.float32(K), jnp.maximum(den, 1e-20))
    fts = jnp.where(uni, msum, num) * pl.reciprocal(den_safe, approx=True)             # (M, P)

    # ---- node_mlp: (BN -> ReLU -> conv) x 2 ----
    h2 = dotf(wt(W_N1, OUT_DIM, MSG_DIM),
              jnp.maximum(fts * col(V_N1S, MSG_DIM) + col(V_N1B, MSG_DIM), 0.0))
    node = dotf(wt(W_N2, OUT_DIM, OUT_DIM),
                jnp.maximum(h2 * col(V_N2S, OUT_DIM) + col(V_N2B, OUT_DIM), 0.0))      # (OUT, P)

    # ---- node squeeze-and-excitation (masked mean over valid points) ----
    n_n = jnp.maximum(jnp.sum(maskr, axis=1, keepdims=True), 1.0)
    yn = jnp.sum(node * maskr, axis=1, keepdims=True) * pl.reciprocal(n_n, approx=True)
    yn1 = jnp.maximum(dotf(wt(W_NS1, 16, OUT_DIM), yn), 0.0)
    gate_n = jax.nn.sigmoid(dotf(wt(W_NS2, OUT_DIM, 16), yn1))
    node = node * gate_n

    # ---- shortcut + gamma-scaled residual ----
    sc = dotf(wt(W_SC, OUT_DIM, NODE_DIM), feat)
    # NOTE: output last dim is P=16 (< 128) -> masked partial stores; negligible at
    # this size, pad/reshape to a lane-dense slab if the kernel is scaled up.
    out_ref[...] = sc + col(V_GAMMA, OUT_DIM) * node


# ---------------- forward wrapper (glue in plain JAX) ----------------
def forward(points, features, lorentz, mask, params):
    # PyTorch NCHW conventions: points (B,2,P), features (B,NODE_DIM,P,1),
    # lorentz (B,4,P) = (px,py,pz,E), mask (B,1,P) bool
    feat_cm = features[..., 0]                                   # (B, 8, P)
    maskrow = mask.astype(jnp.float32)                           # (B, 1, P)

    px, py, pz, en = lorentz[:, 0], lorentz[:, 1], lorentz[:, 2], lorentz[:, 3]
    pt = jnp.sqrt(px * px + py * py)
    # TODO(synk): torch.atan2 (phi) has no reliable Mosaic lowering; it is
    # per-particle, so computed once in plain JAX and passed into the kernel.
    phi = jnp.arctan2(py, px)
    # extra clamp on the log argument: no-op for physical 4-vectors, avoids NaN
    rap = 0.5 * jnp.log(jnp.maximum(1.0 + 2.0 * pz / jnp.maximum(en - pz, 1e-20), 1e-20))
    physt = jnp.stack([px, py, pz, en, pt, rap, phi, jnp.zeros_like(px)], axis=1)  # (B,8,P)

    pad = jnp.zeros((B, NROWS - 17, P), jnp.float32)
    nodeslab = jnp.concatenate([feat_cm, physt, maskrow, pad], axis=1)   # (B, 24, P)

    # ---- kNN on (eta, phi): distance + selection kept in plain JAX ----
    # TODO(synk): torch.topk has no clean Pallas equivalent; jax.lax.top_k here.
    eta, phip = points[:, 0, :], points[:, 1, :]                 # (B, P)
    inner = -2.0 * (eta[:, :, None] * eta[:, None, :])
    etasq = eta * eta
    d_eta = jnp.maximum(etasq[:, :, None] + inner + etasq[:, None, :], 0.0)
    dphi = _delta_phi(phip[:, :, None], phip[:, None, :])
    dist = dphi * dphi + d_eta                                   # (B, P, P)
    _, idx = jax.lax.top_k(-dist, K)     # self-neighbour included (exclude_self=False)
    idx = idx.reshape(B, 1, P * K).astype(jnp.int32)             # per-batch local ids

    node_out = pl.pallas_call(
        _msec_kernel,
        out_shape=jax.ShapeDtypeStruct((B, OUT_DIM, P), jnp.float32),
        grid=(B,),
        in_specs=[
            pl.BlockSpec((None, NROWS, P), lambda b: (b, 0, 0)),   # per-batch node slab
            pl.BlockSpec((None, 1, P * K), lambda b: (b, 0, 0)),   # per-batch kNN indices
            pl.BlockSpec((VROWS, NV), lambda b: (0, 0)),           # BN column slab (f32)
            pl.BlockSpec((W_ROWS, 32), lambda b: (0, 0)),          # weight slab (bf16)
        ],
        out_specs=pl.BlockSpec((None, OUT_DIM, P), lambda b: (b, 0, 0)),
        compiler_params=pltpu.CompilerParams(dimension_semantics=("parallel",)),
    )(nodeslab, idx, params['vcols'], params['wslab'])

    pts_out = points                                             # update_coords=False
    fts_out = node_out[..., None]                                # (B, OUT, P, 1)
    return pts_out, fts_out


# ---------------- deterministic parameter construction (packed) ----------------
def make_params(key):
    ks = iter(jax.random.split(key, 64))

    def bn(c):
        # TODO(synk): BatchNorm2d reproduced in eval mode (folded scale/shift from
        # running stats); training-mode batch statistics not reproduced.
        g = 1.0 + 0.1 * jax.random.normal(next(ks), (c,), jnp.float32)
        b = 0.1 * jax.random.normal(next(ks), (c,), jnp.float32)
        mu = 0.1 * jax.random.normal(next(ks), (c,), jnp.float32)
        var = 0.5 + jnp.abs(jax.random.normal(next(ks), (c,), jnp.float32))
        s = g / jnp.sqrt(var + BN_EPS)
        return s, b - mu * s

    def conv(cin, cout):  # 1x1 Conv / Linear weight stored (Cin, Cout)
        return jax.random.normal(next(ks), (cin, cout), jnp.float32) / math.sqrt(cin)

    EDGE_IN = 2 * ENC_DIM + LV_FTS
    enc_s, enc_b = bn(NODE_DIM); w_enc = conv(NODE_DIM, ENC_DIM)
    e1s, e1b = bn(EDGE_IN);      we1 = conv(EDGE_IN, MSG_DIM)
    e2s, e2b = bn(MSG_DIM);      we2 = conv(MSG_DIM, MSG_DIM)
    wse1 = conv(MSG_DIM, SE_MSG); wse2 = conv(SE_MSG, MSG_DIM)
    sas, sab = bn(MSG_DIM);      wsa = conv(MSG_DIM, MSG_DIM)
    n1s, n1b = bn(MSG_DIM);      wn1 = conv(MSG_DIM, OUT_DIM)
    n2s, n2b = bn(OUT_DIM);      wn2 = conv(OUT_DIM, OUT_DIM)
    wns1 = conv(OUT_DIM, SE_OUT); wns2 = conv(SE_OUT, OUT_DIM)
    wsc = conv(NODE_DIM, OUT_DIM)
    gamma = 1e-5 * jnp.ones((OUT_DIM,), jnp.float32)             # init_scale * ones

    # ---- per-channel vectors packed as columns of one f32 (32, 17) slab ----
    def col(v):
        return jnp.zeros((VROWS,), jnp.float32).at[:v.shape[0]].set(v)

    vcols = jnp.stack([
        col(enc_s), col(enc_b),
        col(e1s[:ENC_DIM]), col(e1b[:ENC_DIM]),                  # centre slice of edge BN
        col(e1s[ENC_DIM:2 * ENC_DIM]), col(e1b[ENC_DIM:2 * ENC_DIM]),   # neighbour slice
        col(e1s[2 * ENC_DIM:]), col(e1b[2 * ENC_DIM:]),          # lv-feature slice
        col(e2s), col(e2b), col(sas), col(sab),
        col(n1s), col(n1b), col(n2s), col(n2b), col(gamma)], axis=1)    # (32, 17)

    # ---- weights packed TRANSPOSED (Cout, Cin) into one bf16 (368, 32) slab ----
    def blk(w, rows):
        w_t = w.T
        out = jnp.zeros((rows, 32), jnp.float32)
        return out.at[:w_t.shape[0], :w_t.shape[1]].set(w_t)

    wslab = jnp.concatenate([
        blk(w_enc, 16),                       # rows   0: 16  (16 x 8)
        blk(we1[:ENC_DIM], 32),               # rows  16: 48  (32 x 16, centre slice)
        blk(we1[ENC_DIM:2 * ENC_DIM], 32),    # rows  48: 80  (32 x 16, neighbour slice)
        blk(we1[2 * ENC_DIM:], 32),           # rows  80:112  (32 x 4,  lv slice)
        blk(we2, 32),                         # rows 112:144
        blk(wse1, 16),                        # rows 144:160  (2 x 32, zero-padded rows)
        blk(wse2, 32),                        # rows 160:192  (32 x 2, zero-padded lanes)
        blk(wsa, 32),                         # rows 192:224
        blk(wn1, 32),                         # rows 224:256
        blk(wn2, 32),                         # rows 256:288
        blk(wns1, 16),                        # rows 288:304
        blk(wns2, 32),                        # rows 304:336
        blk(wsc, 32),                         # rows 336:368
    ], axis=0).astype(jnp.bfloat16)
    assert wslab.shape == (W_ROWS, 32)
    return {'vcols': vcols, 'wslab': wslab}


if __name__ == "__main__":
    ikey = jax.random.PRNGKey(0)
    k1, k2, k3, k4 = jax.random.split(ikey, 4)
    points = 0.5 * jax.random.normal(k1, (B, 2, P), jnp.float32)        # (eta, phi)
    features = jax.random.normal(k2, (B, NODE_DIM, P, 1), jnp.float32)
    p3 = jax.random.normal(k3, (B, 3, P), jnp.float32)
    m0 = 0.1 + jnp.abs(jax.random.normal(k4, (B, 1, P), jnp.float32))
    energy = jnp.sqrt(jnp.sum(p3 * p3, axis=1, keepdims=True) + m0 * m0)
    lorentz = jnp.concatenate([p3, energy], axis=1)                     # (B, 4, P)
    n_valid = jnp.array([P, P - 5])
    mask = jnp.arange(P)[None, None, :] < n_valid[:, None, None]        # (B, 1, P) bool

    params = make_params(jax.random.PRNGKey(1))

    fwd = jax.jit(forward)
    pts_out, fts_out = fwd(points, features, lorentz, mask, params)
    jax.block_until_ready(fts_out)

    assert pts_out.shape == (B, 2, P)
    assert fts_out.shape == (B, OUT_DIM, P, 1)
    assert bool(jnp.all(jnp.isfinite(fts_out)))
    print("KERNEL_OK")
</pallas_src>

<mosaic_0001>
module attributes {stable_mosaic.version = 11 : i64} {
  func.func @_msec_kernel(%arg0: i32, %arg1: memref<1x24x16xf32, #tpu.memory_space<vmem>>, %arg2: memref<1x1x128xi32, #tpu.memory_space<vmem>>, %arg3: memref<32x17xf32, #tpu.memory_space<vmem>>, %arg4: memref<368x32xbf16, #tpu.memory_space<vmem>>, %arg5: memref<1x32x16xf32, #tpu.memory_space<vmem>>) attributes {dimension_semantics = [#tpu.dimension_semantics<parallel>], iteration_bounds = array<i64: 2>, scalar_prefetch = 0 : i64, scratch_operands = 0 : i64, tpu.core_type = #tpu.core_type<tc>, window_params = [{transform_indices = @transform_0, window_bounds = array<i64: 1, 24, 16>}, {transform_indices = @transform_1, window_bounds = array<i64: 1, 1, 128>}, {pipeline_mode = #tpu.pipeline_mode<synchronous>, transform_indices = @transform_2, window_bounds = array<i64: 32, 17>}, {pipeline_mode = #tpu.pipeline_mode<synchronous>, transform_indices = @transform_3, window_bounds = array<i64: 368, 32>}, {transform_indices = @transform_4, window_bounds = array<i64: 1, 32, 16>}]} {
    %c0 = arith.constant 0 : index
    %c0_0 = arith.constant 0 : index
    %c0_1 = arith.constant 0 : index
    %0 = vector.load %arg1[%c0, %c0_0, %c0_1] : memref<1x24x16xf32, #tpu.memory_space<vmem>>, vector<1x8x16xf32>
    %1 = vector.shape_cast %0 : vector<1x8x16xf32> to vector<8x16xf32>
    %c0_2 = arith.constant 0 : index
    %c8 = arith.constant 8 : index
    %c0_3 = arith.constant 0 : index
    %2 = vector.load %arg1[%c0_2, %c8, %c0_3] : memref<1x24x16xf32, #tpu.memory_space<vmem>>, vector<1x8x16xf32>
    %3 = vector.shape_cast %2 : vector<1x8x16xf32> to vector<8x16xf32>
    %c0_4 = arith.constant 0 : index
    %c16 = arith.constant 16 : index
    %c0_5 = arith.constant 0 : index
    %4 = vector.load %arg1[%c0_4, %c16, %c0_5] : memref<1x24x16xf32, #tpu.memory_space<vmem>>, vector<1x1x16xf32>
    %5 = vector.shape_cast %4 : vector<1x1x16xf32> to vector<1x16xf32>
    %c0_6 = arith.constant 0 : index
    %c0_7 = arith.constant 0 : index
    %c0_8 = arith.constant 0 : index
    %6 = vector.load %arg2[%c0_6, %c0_7, %c0_8] : memref<1x1x128xi32, #tpu.memory_space<vmem>>, vector<1x1x128xi32>
    %7 = vector.shape_cast %6 : vector<1x1x128xi32> to vector<1x128xi32>
    %8 = tpu.iota {dimensions = array<i32: 0>} : vector<16x128xi32>
    %9 = tpu.iota {dimensions = array<i32: 1>} : vector<16x128xi32>
    %c8_i32 = arith.constant 8 : i32
    %10 = vector.broadcast %c8_i32 : i32 to vector<16x128xi32>
    %11 = arith.muli %8, %10 : vector<16x128xi32>
    %12 = arith.cmpi sge, %9, %11 : vector<16x128xi32>
    %c8_i32_9 = arith.constant 8 : i32
    %13 = vector.broadcast %c8_i32_9 : i32 to vector<16x128xi32>
    %14 = arith.addi %11, %13 : vector<16x128xi32>
    %15 = arith.cmpi slt, %9, %14 : vector<16x128xi32>
    %16 = arith.andi %12, %15 : vector<16x128xi1>
    %cst = arith.constant 1.000000e+00 : f32
    %cst_10 = arith.constant 0.000000e+00 : f32
    %17 = vector.broadcast %cst : f32 to vector<16x128xf32>
    %18 = vector.broadcast %cst_10 : f32 to vector<16x128xf32>
    %19 = arith.select %16, %17, %18 : vector<16x128xi1>, vector<16x128xf32>
    %20 = vector.broadcast %7 : vector<1x128xi32> to vector<16x128xi32>
    %21 = arith.cmpi eq, %8, %20 : vector<16x128xi32>
    %cst_11 = arith.constant 1.000000e+00 : f32
    %cst_12 = arith.constant 0.000000e+00 : f32
    %22 = vector.broadcast %cst_11 : f32 to vector<16x128xf32>
    %23 = vector.broadcast %cst_12 : f32 to vector<16x128xf32>
    %24 = arith.select %21, %22, %23 : vector<16x128xi1>, vector<16x128xf32>
    %c0_13 = arith.constant 0 : index
    %c0_14 = arith.constant 0 : index
    %25 = vector.load %arg4[%c0_13, %c0_14] : memref<368x32xbf16, #tpu.memory_space<vmem>>, vector<16x8xbf16>
    %c0_15 = arith.constant 0 : index
    %c0_16 = arith.constant 0 : index
    %26 = vector.load %arg3[%c0_15, %c0_16] : memref<32x17xf32, #tpu.memory_space<vmem>>, vector<8x1xf32>
    %27 = vector.broadcast %26 : vector<8x1xf32> to vector<8x16xf32>
    %28 = arith.mulf %1, %27 : vector<8x16xf32>
    %c0_17 = arith.constant 0 : index
    %c1 = arith.constant 1 : index
    %29 = vector.load %arg3[%c0_17, %c1] : memref<32x17xf32, #tpu.memory_space<vmem>>, vector<8x1xf32>
    %30 = vector.broadcast %29 : vector<8x1xf32> to vector<8x16xf32>
    %31 = arith.addf %28, %30 : vector<8x16xf32>
    %cst_18 = arith.constant 0.000000e+00 : f32
    %32 = vector.broadcast %cst_18 : f32 to vector<8x16xf32>
    %33 = arith.maximumf %31, %32 : vector<8x16xf32>
    %34 = arith.truncf %33 : vector<8x16xf32> to vector<8x16xbf16>
    %cst_19 = arith.constant dense<0.000000e+00> : vector<16x16xf32>
    %35 = tpu.matmul %25, %34, %cst_19 {dimension_numbers = #tpu.dot_dimension_numbers<[1], [0], [0], [1], [0, 0, 1, 1], [], []>} : vector<16x8xbf16>, vector<8x16xbf16>, vector<16x16xf32> -> vector<16x16xf32>
    %c16_20 = arith.constant 16 : index
    %c0_21 = arith.constant 0 : index
    %36 = vector.load %arg4[%c16_20, %c0_21] : memref<368x32xbf16, #tpu.memory_space<vmem>>, vector<32x16xbf16>
    %c0_22 = arith.constant 0 : index
    %c2 = arith.constant 2 : index
    %37 = vector.load %arg3[%c0_22, %c2] : memref<32x17xf32, #tpu.memory_space<vmem>>, vector<16x1xf32>
    %38 = vector.broadcast %37 : vector<16x1xf32> to vector<16x16xf32>
    %39 = arith.mulf %35, %38 : vector<16x16xf32>
    %c0_23 = arith.constant 0 : index
    %c3 = arith.constant 3 : index
    %40 = vector.load %arg3[%c0_23, %c3] : memref<32x17xf32, #tpu.memory_space<vmem>>, vector<16x1xf32>
    %41 = vector.broadcast %40 : vector<16x1xf32> to vector<16x16xf32>
    %42 = arith.addf %39, %41 : vector<16x16xf32>
    %cst_24 = arith.constant 0.000000e+00 : f32
    %43 = vector.broadcast %cst_24 : f32 to vector<16x16xf32>
    %44 = arith.maximumf %42, %43 : vector<16x16xf32>
    %45 = arith.truncf %44 : vector<16x16xf32> to vector<16x16xbf16>
    %cst_25 = arith.constant dense<0.000000e+00> : vector<32x16xf32>
    %46 = tpu.matmul %36, %45, %cst_25 {dimension_numbers = #tpu.dot_dimension_numbers<[1], [0], [0], [1], [0, 0, 1, 1], [], []>} : vector<32x16xbf16>, vector<16x16xbf16>, vector<32x16xf32> -> vector<32x16xf32>
    %c48 = arith.constant 48 : index
    %c0_26 = arith.constant 0 : index
    %47 = vector.load %arg4[%c48, %c0_26] : memref<368x32xbf16, #tpu.memory_space<vmem>>, vector<32x16xbf16>
    %c0_27 = arith.constant 0 : index
    %c4 = arith.constant 4 : index
    %48 = vector.load %arg3[%c0_27, %c4] : memref<32x17xf32, #tpu.memory_space<vmem>>, vector<16x1xf32>
    %49 = vector.broadcast %48 : vector<16x1xf32> to vector<16x16xf32>
    %50 = arith.mulf %35, %49 : vector<16x16xf32>
    %c0_28 = arith.constant 0 : index
    %c5 = arith.constant 5 : index
    %51 = vector.load %arg3[%c0_28, %c5] : memref<32x17xf32, #tpu.memory_space<vmem>>, vector<16x1xf32>
    %52 = vector.broadcast %51 : vector<16x1xf32> to vector<16x16xf32>
    %53 = arith.addf %50, %52 : vector<16x16xf32>
    %cst_29 = arith.constant 0.000000e+00 : f32
    %54 = vector.broadcast %cst_29 : f32 to vector<16x16xf32>
    %55 = arith.maximumf %53, %54 : vector<16x16xf32>
    %56 = arith.truncf %55 : vector<16x16xf32> to vector<16x16xbf16>
    %cst_30 = arith.constant dense<0.000000e+00> : vector<32x16xf32>
    %57 = tpu.matmul %47, %56, %cst_30 {dimension_numbers = #tpu.dot_dimension_numbers<[1], [0], [0], [1], [0, 0, 1, 1], [], []>} : vector<32x16xbf16>, vector<16x16xbf16>, vector<32x16xf32> -> vector<32x16xf32>
    %cst_31 = arith.constant dense<0.000000e+00> : vector<8x128xf32>
    %58 = tpu.matmul %3, %19, %cst_31 {dimension_numbers = #tpu.dot_dimension_numbers<[1], [0], [0], [1], [0, 0, 1, 1], [], []>} : vector<8x16xf32>, vector<16x128xf32>, vector<8x128xf32> -> vector<8x128xf32>
    %cst_32 = arith.constant dense<0.000000e+00> : vector<8x128xf32>
    %59 = tpu.matmul %3, %24, %cst_32 {dimension_numbers = #tpu.dot_dimension_numbers<[1], [0], [0], [1], [0, 0, 1, 1], [], []>} : vector<8x16xf32>, vector<16x128xf32>, vector<8x128xf32> -> vector<8x128xf32>
    %cst_33 = arith.constant dense<0.000000e+00> : vector<32x128xf32>
    %60 = tpu.matmul %46, %19, %cst_33 {dimension_numbers = #tpu.dot_dimension_numbers<[1], [0], [0], [1], [0, 0, 1, 1], [], []>} : vector<32x16xf32>, vector<16x128xf32>, vector<32x128xf32> -> vector<32x128xf32>
    %cst_34 = arith.constant dense<0.000000e+00> : vector<32x128xf32>
    %61 = tpu.matmul %57, %24, %cst_34 {dimension_numbers = #tpu.dot_dimension_numbers<[1], [0], [0], [1], [0, 0, 1, 1], [], []>} : vector<32x16xf32>, vector<16x128xf32>, vector<32x128xf32> -> vector<32x128xf32>
    %cst_35 = arith.constant dense<0.000000e+00> : vector<1x128xf32>
    %62 = tpu.matmul %5, %19, %cst_35 {dimension_numbers = #tpu.dot_dimension_numbers<[1], [0], [0], [1], [0, 0, 1, 1], [], []>} : vector<1x16xf32>, vector<16x128xf32>, vector<1x128xf32> -> vector<1x128xf32>
    %cst_36 = arith.constant dense<0.000000e+00> : vector<1x128xf32>
    %63 = tpu.matmul %5, %24, %cst_36 {dimension_numbers = #tpu.dot_dimension_numbers<[1], [0], [0], [1], [0, 0, 1, 1], [], []>} : vector<1x16xf32>, vector<16x128xf32>, vector<1x128xf32> -> vector<1x128xf32>
    %64 = arith.mulf %62, %63 : vector<1x128xf32>
    %65 = vector.extract_strided_slice %58 {offsets = [0, 0], sizes = [1, 128], strides = [1, 1]} : vector<8x128xf32> to vector<1x128xf32>
    %66 = vector.extract_strided_slice %58 {offsets = [1, 0], sizes = [1, 128], strides = [1, 1]} : vector<8x128xf32> to vector<1x128xf32>
    %67 = vector.extract_strided_slice %58 {offsets = [2, 0], sizes = [1, 128], strides = [1, 1]} : vector<8x128xf32> to vector<1x128xf32>
    %68 = vector.extract_strided_slice %58 {offsets = [3, 0], sizes = [1, 128], strides = [1, 1]} : vector<8x128xf32> to vector<1x128xf32>
    %69 = vector.extract_strided_slice %58 {offsets = [4, 0], sizes = [1, 128], strides = [1, 1]} : vector<8x128xf32> to vector<1x128xf32>
    %70 = vector.extract_strided_slice %58 {offsets = [5, 0], sizes = [1, 128], strides = [1, 1]} : vector<8x128xf32> to vector<1x128xf32>
    %71 = vector.extract_strided_slice %58 {offsets = [6, 0], sizes = [1, 128], strides = [1, 1]} : vector<8x128xf32> to vector<1x128xf32>
    %72 = vector.extract_strided_slice %59 {offsets = [0, 0], sizes = [1, 128], strides = [1, 1]} : vector<8x128xf32> to vector<1x128xf32>
    %73 = vector.extract_strided_slice %59 {offsets = [1, 0], sizes = [1, 128], strides = [1, 1]} : vector<8x128xf32> to vector<1x128xf32>
    %74 = vector.extract_strided_slice %59 {offsets = [2, 0], sizes = [1, 128], strides = [1, 1]} : vector<8x128xf32> to vector<1x128xf32>
    %75 = vector.extract_strided_slice %59 {offsets = [3, 0], sizes = [1, 128], strides = [1, 1]} : vector<8x128xf32> to vector<1x128xf32>
    %76 = vector.extract_strided_slice %59 {offsets = [4, 0], sizes = [1, 128], strides = [1, 1]} : vector<8x128xf32> to vector<1x128xf32>
    %77 = vector.extract_strided_slice %59 {offsets = [5, 0], sizes = [1, 128], strides = [1, 1]} : vector<8x128xf32> to vector<1x128xf32>
    %78 = vector.extract_strided_slice %59 {offsets = [6, 0], sizes = [1, 128], strides = [1, 1]} : vector<8x128xf32> to vector<1x128xf32>
    %79 = arith.minimumf %69, %76 : vector<1x128xf32>
    %80 = arith.subf %70, %77 : vector<1x128xf32>
    %81 = arith.subf %71, %78 : vector<1x128xf32>
    %cst_37 = arith.constant 3.14159274 : f32
    %82 = vector.broadcast %cst_37 : f32 to vector<1x128xf32>
    %83 = arith.addf %81, %82 : vector<1x128xf32>
    %cst_38 = arith.constant 0.159154937 : f32
    %84 = vector.broadcast %cst_38 : f32 to vector<1x128xf32>
    %85 = arith.mulf %83, %84 : vector<1x128xf32>
    %86 = math.floor %85 : vector<1x128xf32>
    %cst_39 = arith.constant 6.28318548 : f32
    %87 = vector.broadcast %cst_39 : f32 to vector<1x128xf32>
    %88 = arith.mulf %87, %86 : vector<1x128xf32>
    %89 = arith.subf %83, %88 : vector<1x128xf32>
    %cst_40 = arith.constant 3.14159274 : f32
    %90 = vector.broadcast %cst_40 : f32 to vector<1x128xf32>
    %91 = arith.subf %89, %90 : vector<1x128xf32>
    %92 = arith.mulf %80, %80 : vector<1x128xf32>
    %93 = arith.mulf %91, %91 : vector<1x128xf32>
    %94 = arith.addf %92, %93 : vector<1x128xf32>
    %95 = math.sqrt %94 : vector<1x128xf32>
    %cst_41 = arith.constant 9.99999993E-9 : f32
    %96 = vector.broadcast %cst_41 : f32 to vector<1x128xf32>
    %97 = arith.maximumf %95, %96 : vector<1x128xf32>
    %98 = math.log %97 : vector<1x128xf32>
    %99 = arith.mulf %79, %95 : vector<1x128xf32>
    %cst_42 = arith.constant 9.99999993E-9 : f32
    %100 = vector.broadcast %cst_42 : f32 to vector<1x128xf32>
    %101 = arith.maximumf %99, %100 : vector<1x128xf32>
    %102 = math.log %101 : vector<1x128xf32>
    %103 = arith.addf %69, %76 : vector<1x128xf32>
    %cst_43 = arith.constant 9.99999993E-9 : f32
    %104 = vector.broadcast %cst_43 : f32 to vector<1x128xf32>
    %105 = arith.maximumf %103, %104 : vector<1x128xf32>
    %106 = arith.divf %79, %105 : vector<1x128xf32>
    %cst_44 = arith.constant 9.99999993E-9 : f32
    %107 = vector.broadcast %cst_44 : f32 to vector<1x128xf32>
    %108 = arith.maximumf %106, %107 : vector<1x128xf32>
    %109 = math.log %108 : vector<1x128xf32>
    %110 = arith.addf %65, %72 : vector<1x128xf32>
    %111 = arith.addf %66, %73 : vector<1x128xf32>
    %112 = arith.addf %67, %74 : vector<1x128xf32>
    %113 = arith.addf %68, %75 : vector<1x128xf32>
    %114 = arith.mulf %113, %113 : vector<1x128xf32>
    %115 = arith.mulf %110, %110 : vector<1x128xf32>
    %116 = arith.mulf %111, %111 : vector<1x128xf32>
    %117 = arith.addf %115, %116 : vector<1x128xf32>
    %118 = arith.mulf %112, %112 : vector<1x128xf32>
    %119 = arith.addf %117, %118 : vector<1x128xf32>
    %120 = arith.subf %114, %119 : vector<1x128xf32>
    %cst_45 = arith.constant 9.99999993E-9 : f32
    %121 = vector.broadcast %cst_45 : f32 to vector<1x128xf32>
    %122 = arith.maximumf %120, %121 : vector<1x128xf32>
    %123 = math.log %122 : vector<1x128xf32>
    %124 = tpu.concatenate %102, %109, %98, %123 in 0 : vector<1x128xf32>, vector<1x128xf32>, vector<1x128xf32>, vector<1x128xf32> -> vector<4x128xf32>
    %125 = arith.addf %60, %61 : vector<32x128xf32>
    %c80 = arith.constant 80 : index
    %c0_46 = arith.constant 0 : index
    %126 = vector.load %arg4[%c80, %c0_46] : memref<368x32xbf16, #tpu.memory_space<vmem>>, vector<32x4xbf16>
    %c0_47 = arith.constant 0 : index
    %c6 = arith.constant 6 : index
    %127 = vector.load %arg3[%c0_47, %c6] : memref<32x17xf32, #tpu.memory_space<vmem>>, vector<4x1xf32>
    %128 = vector.broadcast %127 : vector<4x1xf32> to vector<4x128xf32>
    %129 = arith.mulf %124, %128 : vector<4x128xf32>
    %c0_48 = arith.constant 0 : index
    %c7 = arith.constant 7 : index
    %130 = vector.load %arg3[%c0_48, %c7] : memref<32x17xf32, #tpu.memory_space<vmem>>, vector<4x1xf32>
    %131 = vector.broadcast %130 : vector<4x1xf32> to vector<4x128xf32>
    %132 = arith.addf %129, %131 : vector<4x128xf32>
    %cst_49 = arith.constant 0.000000e+00 : f32
    %133 = vector.broadcast %cst_49 : f32 to vector<4x128xf32>
    %134 = arith.maximumf %132, %133 : vector<4x128xf32>
    %135 = arith.truncf %134 : vector<4x128xf32> to vector<4x128xbf16>
    %cst_50 = arith.constant dense<0.000000e+00> : vector<32x128xf32>
    %136 = tpu.matmul %126, %135, %cst_50 {dimension_numbers = #tpu.dot_dimension_numbers<[1], [0], [0], [1], [0, 0, 1, 1], [], []>} : vector<32x4xbf16>, vector<4x128xbf16>, vector<32x128xf32> -> vector<32x128xf32>
    %137 = arith.addf %125, %136 : vector<32x128xf32>
    %c112 = arith.constant 112 : index
    %c0_51 = arith.constant 0 : index
    %138 = vector.load %arg4[%c112, %c0_51] : memref<368x32xbf16, #tpu.memory_space<vmem>>, vector<32x32xbf16>
    %c0_52 = arith.constant 0 : index
    %c8_53 = arith.constant 8 : index
    %139 = vector.load %arg3[%c0_52, %c8_53] : memref<32x17xf32, #tpu.memory_space<vmem>>, vector<32x1xf32>
    %140 = vector.broadcast %139 : vector<32x1xf32> to vector<32x128xf32>
    %141 = arith.mulf %137, %140 : vector<32x128xf32>
    %c0_54 = arith.constant 0 : index
    %c9 = arith.constant 9 : index
    %142 = vector.load %arg3[%c0_54, %c9] : memref<32x17xf32, #tpu.memory_space<vmem>>, vector<32x1xf32>
    %143 = vector.broadcast %142 : vector<32x1xf32> to vector<32x128xf32>
    %144 = arith.addf %141, %143 : vector<32x128xf32>
    %cst_55 = arith.constant 0.000000e+00 : f32
    %145 = vector.broadcast %cst_55 : f32 to vector<32x128xf32>
    %146 = arith.maximumf %144, %145 : vector<32x128xf32>
    %147 = arith.truncf %146 : vector<32x128xf32> to vector<32x128xbf16>
    %cst_56 = arith.constant dense<0.000000e+00> : vector<32x128xf32>
    %148 = tpu.matmul %138, %147, %cst_56 {dimension_numbers = #tpu.dot_dimension_numbers<[1], [0], [0], [1], [0, 0, 1, 1], [], []>} : vector<32x32xbf16>, vector<32x128xbf16>, vector<32x128xf32> -> vector<32x128xf32>
    %cst_57 = arith.constant dense<0.000000e+00> : vector<1xf32>
    %149 = vector.multi_reduction <add>, %64, %cst_57 [1] : vector<1x128xf32> to vector<1xf32>
    %150 = vector.shape_cast %149 : vector<1xf32> to vector<1x1xf32>
    %cst_58 = arith.constant 1.000000e+00 : f32
    %151 = vector.broadcast %cst_58 : f32 to vector<1x1xf32>
    %152 = arith.maximumf %150, %151 : vector<1x1xf32>
    %153 = vector.broadcast %64 : vector<1x128xf32> to vector<32x128xf32>
    %154 = arith.mulf %148, %153 : vector<32x128xf32>
    %cst_59 = arith.constant dense<0.000000e+00> : vector<32xf32>
    %155 = vector.multi_reduction <add>, %154, %cst_59 [1] : vector<32x128xf32> to vector<32xf32>
    %156 = vector.shape_cast %155 : vector<32xf32> to vector<32x1xf32>
    %157 = tpu.reciprocal %152 {approx = true} : vector<1x1xf32> -> vector<1x1xf32>
    %158 = vector.broadcast %157 : vector<1x1xf32> to vector<32x1xf32>
    %159 = arith.mulf %156, %158 : vector<32x1xf32>
    %c144 = arith.constant 144 : index
    %c0_60 = arith.constant 0 : index
    %160 = vector.load %arg4[%c144, %c0_60] : memref<368x32xbf16, #tpu.memory_space<vmem>>, vector<16x32xbf16>
    %161 = arith.truncf %159 : vector<32x1xf32> to vector<32x1xbf16>
    %cst_61 = arith.constant dense<0.000000e+00> : vector<16x1xf32>
    %162 = tpu.matmul %160, %161, %cst_61 {dimension_numbers = #tpu.dot_dimension_numbers<[1], [0], [0], [1], [0, 0, 1, 1], [], []>} : vector<16x32xbf16>, vector<32x1xbf16>, vector<16x1xf32> -> vector<16x1xf32>
    %cst_62 = arith.constant 0.000000e+00 : f32
    %163 = vector.broadcast %cst_62 : f32 to vector<16x1xf32>
    %164 = arith.maximumf %162, %163 : vector<16x1xf32>
    %c160 = arith.constant 160 : index
    %c0_63 = arith.constant 0 : index
    %165 = vector.load %arg4[%c160, %c0_63] : memref<368x32xbf16, #tpu.memory_space<vmem>>, vector<32x16xbf16>
    %166 = arith.truncf %164 : vector<16x1xf32> to vector<16x1xbf16>
    %cst_64 = arith.constant dense<0.000000e+00> : vector<32x1xf32>
    %167 = tpu.matmul %165, %166, %cst_64 {dimension_numbers = #tpu.dot_dimension_numbers<[1], [0], [0], [1], [0, 0, 1, 1], [], []>} : vector<32x16xbf16>, vector<16x1xbf16>, vector<32x1xf32> -> vector<32x1xf32>
    %168 = arith.negf %167 : vector<32x1xf32>
    %169 = math.exp %168 : vector<32x1xf32>
    %cst_65 = arith.constant 1.000000e+00 : f32
    %170 = vector.broadcast %cst_65 : f32 to vector<32x1xf32>
    %171 = arith.addf %170, %169 : vector<32x1xf32>
    %172 = arith.divf %170, %171 : vector<32x1xf32>
    %173 = vector.broadcast %172 : vector<32x1xf32> to vector<32x128xf32>
    %174 = arith.mulf %148, %173 : vector<32x128xf32>
    %c0_66 = arith.constant 0 : index
    %c10 = arith.constant 10 : index
    %175 = vector.load %arg3[%c0_66, %c10] : memref<32x17xf32, #tpu.memory_space<vmem>>, vector<32x1xf32>
    %176 = vector.broadcast %175 : vector<32x1xf32> to vector<32x128xf32>
    %177 = arith.mulf %174, %176 : vector<32x128xf32>
    %c0_67 = arith.constant 0 : index
    %c11 = arith.constant 11 : index
    %178 = vector.load %arg3[%c0_67, %c11] : memref<32x17xf32, #tpu.memory_space<vmem>>, vector<32x1xf32>
    %179 = vector.broadcast %178 : vector<32x1xf32> to vector<32x128xf32>
    %180 = arith.addf %177, %179 : vector<32x128xf32>
    %cst_68 = arith.constant 0.000000e+00 : f32
    %181 = vector.broadcast %cst_68 : f32 to vector<32x128xf32>
    %182 = arith.maximumf %180, %181 : vector<32x128xf32>
    %c192 = arith.constant 192 : index
    %c0_69 = arith.constant 0 : index
    %183 = vector.load %arg4[%c192, %c0_69] : memref<368x32xbf16, #tpu.memory_space<vmem>>, vector<32x32xbf16>
    %184 = arith.truncf %182 : vector<32x128xf32> to vector<32x128xbf16>
    %cst_70 = arith.constant dense<0.000000e+00> : vector<32x128xf32>
    %185 = tpu.matmul %183, %184, %cst_70 {dimension_numbers = #tpu.dot_dimension_numbers<[1], [0], [0], [1], [0, 0, 1, 1], [], []>} : vector<32x32xbf16>, vector<32x128xbf16>, vector<32x128xf32> -> vector<32x128xf32>
    %cst_71 = arith.constant 0.000000e+00 : f32
    %186 = vector.broadcast %cst_71 : f32 to vector<1x128xf32>
    %187 = arith.cmpf ogt, %64, %186 : vector<1x128xf32>
    %cst_72 = arith.constant -1.000000e+09 : f32
    %188 = vector.shape_cast %187 : vector<1x128xi1> to vector<1x128xi1>
    %189 = vector.broadcast %188 : vector<1x128xi1> to vector<32x128xi1>
    %190 = vector.broadcast %cst_72 : f32 to vector<32x128xf32>
    %191 = arith.select %189, %185, %190 : vector<32x128xi1>, vector<32x128xf32>
    %cst_73 = arith.constant dense<0xFF800000> : vector<32xf32>
    %192 = vector.multi_reduction <maximumf>, %191, %cst_73 [1] : vector<32x128xf32> to vector<32xf32>
    %193 = vector.shape_cast %192 : vector<32xf32> to vector<32x1xf32>
    %194 = vector.broadcast %193 : vector<32x1xf32> to vector<32x128xf32>
    %195 = arith.subf %191, %194 : vector<32x128xf32>
    %196 = math.exp %195 : vector<32x128xf32>
    %197 = arith.mulf %196, %174 : vector<32x128xf32>
    %cst_74 = arith.constant dense<0.000000e+00> : vector<32x16xf32>
    %198 = tpu.matmul %197, %19, %cst_74 {dimension_numbers = #tpu.dot_dimension_numbers<[1], [1], [0], [0], [0, 0, 1, 0], [], []>} : vector<32x128xf32>, vector<16x128xf32>, vector<32x16xf32> -> vector<32x16xf32>
    %cst_75 = arith.constant dense<0.000000e+00> : vector<32x16xf32>
    %199 = tpu.matmul %196, %19, %cst_75 {dimension_numbers = #tpu.dot_dimension_numbers<[1], [1], [0], [0], [0, 0, 1, 0], [], []>} : vector<32x128xf32>, vector<16x128xf32>, vector<32x16xf32> -> vector<32x16xf32>
    %cst_76 = arith.constant dense<0.000000e+00> : vector<32x16xf32>
    %200 = tpu.matmul %174, %19, %cst_76 {dimension_numbers = #tpu.dot_dimension_numbers<[1], [1], [0], [0], [0, 0, 1, 0], [], []>} : vector<32x128xf32>, vector<16x128xf32>, vector<32x16xf32> -> vector<32x16xf32>
    %cst_77 = arith.constant 0.000000e+00 : f32
    %201 = vector.broadcast %cst_77 : f32 to vector<32x16xf32>
    %202 = arith.cmpf ole, %199, %201 : vector<32x16xf32>
    %cst_78 = arith.constant 9.99999968E-21 : f32
    %203 = vector.broadcast %cst_78 : f32 to vector<32x16xf32>
    %204 = arith.maximumf %199, %203 : vector<32x16xf32>
    %cst_79 = arith.constant 8.000000e+00 : f32
    %205 = vector.broadcast %cst_79 : f32 to vector<32x16xf32>
    %206 = arith.select %202, %205, %204 : vector<32x16xi1>, vector<32x16xf32>
    %207 = arith.select %202, %200, %198 : vector<32x16xi1>, vector<32x16xf32>
    %208 = tpu.reciprocal %206 {approx = true} : vector<32x16xf32> -> vector<32x16xf32>
    %209 = arith.mulf %207, %208 : vector<32x16xf32>
    %c224 = arith.constant 224 : index
    %c0_80 = arith.constant 0 : index
    %210 = vector.load %arg4[%c224, %c0_80] : memref<368x32xbf16, #tpu.memory_space<vmem>>, vector<32x32xbf16>
    %c0_81 = arith.constant 0 : index
    %c12 = arith.constant 12 : index
    %211 = vector.load %arg3[%c0_81, %c12] : memref<32x17xf32, #tpu.memory_space<vmem>>, vector<32x1xf32>
    %212 = vector.broadcast %211 : vector<32x1xf32> to vector<32x16xf32>
    %213 = arith.mulf %209, %212 : vector<32x16xf32>
    %c0_82 = arith.constant 0 : index
    %c13 = arith.constant 13 : index
    %214 = vector.load %arg3[%c0_82, %c13] : memref<32x17xf32, #tpu.memory_space<vmem>>, vector<32x1xf32>
    %215 = vector.broadcast %214 : vector<32x1xf32> to vector<32x16xf32>
    %216 = arith.addf %213, %215 : vector<32x16xf32>
    %cst_83 = arith.constant 0.000000e+00 : f32
    %217 = vector.broadcast %cst_83 : f32 to vector<32x16xf32>
    %218 = arith.maximumf %216, %217 : vector<32x16xf32>
    %219 = arith.truncf %218 : vector<32x16xf32> to vector<32x16xbf16>
    %cst_84 = arith.constant dense<0.000000e+00> : vector<32x16xf32>
    %220 = tpu.matmul %210, %219, %cst_84 {dimension_numbers = #tpu.dot_dimension_numbers<[1], [0], [0], [1], [0, 0, 1, 1], [], []>} : vector<32x32xbf16>, vector<32x16xbf16>, vector<32x16xf32> -> vector<32x16xf32>
    %c256 = arith.constant 256 : index
    %c0_85 = arith.constant 0 : index
    %221 = vector.load %arg4[%c256, %c0_85] : memref<368x32xbf16, #tpu.memory_space<vmem>>, vector<32x32xbf16>
    %c0_86 = arith.constant 0 : index
    %c14 = arith.constant 14 : index
    %222 = vector.load %arg3[%c0_86, %c14] : memref<32x17xf32, #tpu.memory_space<vmem>>, vector<32x1xf32>
    %223 = vector.broadcast %222 : vector<32x1xf32> to vector<32x16xf32>
    %224 = arith.mulf %220, %223 : vector<32x16xf32>
    %c0_87 = arith.constant 0 : index
    %c15 = arith.constant 15 : index
    %225 = vector.load %arg3[%c0_87, %c15] : memref<32x17xf32, #tpu.memory_space<vmem>>, vector<32x1xf32>
    %226 = vector.broadcast %225 : vector<32x1xf32> to vector<32x16xf32>
    %227 = arith.addf %224, %226 : vector<32x16xf32>
    %cst_88 = arith.constant 0.000000e+00 : f32
    %228 = vector.broadcast %cst_88 : f32 to vector<32x16xf32>
    %229 = arith.maximumf %227, %228 : vector<32x16xf32>
    %230 = arith.truncf %229 : vector<32x16xf32> to vector<32x16xbf16>
    %cst_89 = arith.constant dense<0.000000e+00> : vector<32x16xf32>
    %231 = tpu.matmul %221, %230, %cst_89 {dimension_numbers = #tpu.dot_dimension_numbers<[1], [0], [0], [1], [0, 0, 1, 1], [], []>} : vector<32x32xbf16>, vector<32x16xbf16>, vector<32x16xf32> -> vector<32x16xf32>
    %cst_90 = arith.constant dense<0.000000e+00> : vector<1xf32>
    %232 = vector.multi_reduction <add>, %5, %cst_90 [1] : vector<1x16xf32> to vector<1xf32>
    %233 = vector.shape_cast %232 : vector<1xf32> to vector<1x1xf32>
    %cst_91 = arith.constant 1.000000e+00 : f32
    %234 = vector.broadcast %cst_91 : f32 to vector<1x1xf32>
    %235 = arith.maximumf %233, %234 : vector<1x1xf32>
    %236 = vector.broadcast %5 : vector<1x16xf32> to vector<32x16xf32>
    %237 = arith.mulf %231, %236 : vector<32x16xf32>
    %cst_92 = arith.constant dense<0.000000e+00> : vector<32xf32>
    %238 = vector.multi_reduction <add>, %237, %cst_92 [1] : vector<32x16xf32> to vector<32xf32>
    %239 = vector.shape_cast %238 : vector<32xf32> to vector<32x1xf32>
    %240 = tpu.reciprocal %235 {approx = true} : vector<1x1xf32> -> vector<1x1xf32>
    %241 = vector.broadcast %240 : vector<1x1xf32> to vector<32x1xf32>
    %242 = arith.mulf %239, %241 : vector<32x1xf32>
    %c288 = arith.constant 288 : index
    %c0_93 = arith.constant 0 : index
    %243 = vector.load %arg4[%c288, %c0_93] : memref<368x32xbf16, #tpu.memory_space<vmem>>, vector<16x32xbf16>
    %244 = arith.truncf %242 : vector<32x1xf32> to vector<32x1xbf16>
    %cst_94 = arith.constant dense<0.000000e+00> : vector<16x1xf32>
    %245 = tpu.matmul %243, %244, %cst_94 {dimension_numbers = #tpu.dot_dimension_numbers<[1], [0], [0], [1], [0, 0, 1, 1], [], []>} : vector<16x32xbf16>, vector<32x1xbf16>, vector<16x1xf32> -> vector<16x1xf32>
    %cst_95 = arith.constant 0.000000e+00 : f32
    %246 = vector.broadcast %cst_95 : f32 to vector<16x1xf32>
    %247 = arith.maximumf %245, %246 : vector<16x1xf32>
    %c304 = arith.constant 304 : index
    %c0_96 = arith.constant 0 : index
    %248 = vector.load %arg4[%c304, %c0_96] : memref<368x32xbf16, #tpu.memory_space<vmem>>, vector<32x16xbf16>
    %249 = arith.truncf %247 : vector<16x1xf32> to vector<16x1xbf16>
    %cst_97 = arith.constant dense<0.000000e+00> : vector<32x1xf32>
    %250 = tpu.matmul %248, %249, %cst_97 {dimension_numbers = #tpu.dot_dimension_numbers<[1], [0], [0], [1], [0, 0, 1, 1], [], []>} : vector<32x16xbf16>, vector<16x1xbf16>, vector<32x1xf32> -> vector<32x1xf32>
    %251 = arith.negf %250 : vector<32x1xf32>
    %252 = math.exp %251 : vector<32x1xf32>
    %cst_98 = arith.constant 1.000000e+00 : f32
    %253 = vector.broadcast %cst_98 : f32 to vector<32x1xf32>
    %254 = arith.addf %253, %252 : vector<32x1xf32>
    %255 = arith.divf %253, %254 : vector<32x1xf32>
    %256 = vector.broadcast %255 : vector<32x1xf32> to vector<32x16xf32>
    %257 = arith.mulf %231, %256 : vector<32x16xf32>
    %c336 = arith.constant 336 : index
    %c0_99 = arith.constant 0 : index
    %258 = vector.load %arg4[%c336, %c0_99] : memref<368x32xbf16, #tpu.memory_space<vmem>>, vector<32x8xbf16>
    %259 = arith.truncf %1 : vector<8x16xf32> to vector<8x16xbf16>
    %cst_100 = arith.constant dense<0.000000e+00> : vector<32x16xf32>
    %260 = tpu.matmul %258, %259, %cst_100 {dimension_numbers = #tpu.dot_dimension_numbers<[1], [0], [0], [1], [0, 0, 1, 1], [], []>} : vector<32x8xbf16>, vector<8x16xbf16>, vector<32x16xf32> -> vector<32x16xf32>
    %c0_101 = arith.constant 0 : index
    %c16_102 = arith.constant 16 : index
    %261 = vector.load %arg3[%c0_101, %c16_102] : memref<32x17xf32, #tpu.memory_space<vmem>>, vector<32x1xf32>
    %262 = vector.broadcast %261 : vector<32x1xf32> to vector<32x16xf32>
    %263 = arith.mulf %262, %257 : vector<32x16xf32>
    %264 = arith.addf %260, %263 : vector<32x16xf32>
    %c0_103 = arith.constant 0 : index
    %c0_104 = arith.constant 0 : index
    %c0_105 = arith.constant 0 : index
    %265 = vector.load %arg5[%c0_103, %c0_104, %c0_105] : memref<1x32x16xf32, #tpu.memory_space<vmem>>, vector<1x32x16xf32>
    %266 = vector.shape_cast %265 : vector<1x32x16xf32> to vector<32x16xf32>
    %267 = vector.shape_cast %264 : vector<32x16xf32> to vector<1x32x16xf32>
    tpu.vector_store %arg5[%c0_103, %c0_104, %c0_105], %267 {strides = array<i32>} : memref<1x32x16xf32, #tpu.memory_space<vmem>>, vector<1x32x16xf32>,
    return
  }
  func.func @transform_0(%arg0: i32) -> (i32, i32, i32) {
    %c0_i32 = arith.constant 0 : i32
    %c0_i32_0 = arith.constant 0 : i32
    %c0_i32_1 = arith.constant 0 : i32
    return %arg0, %c0_i32, %c0_i32_0 : i32, i32, i32
  }
  func.func @transform_1(%arg0: i32) -> (i32, i32, i32) {
    %c0_i32 = arith.constant 0 : i32
    %c0_i32_0 = arith.constant 0 : i32
    %c0_i32_1 = arith.constant 0 : i32
    return %arg0, %c0_i32, %c0_i32_0 : i32, i32, i32
  }
  func.func @transform_2(%arg0: i32) -> (i32, i32) {
    %c0_i32 = arith.constant 0 : i32
    %c0_i32_0 = arith.constant 0 : i32
    %c0_i32_1 = arith.constant 0 : i32
    return %c0_i32, %c0_i32_0 : i32, i32
  }
  func.func @transform_3(%arg0: i32) -> (i32, i32) {
    %c0_i32 = arith.constant 0 : i32
    %c0_i32_0 = arith.constant 0 : i32
    %c0_i32_1 = arith.constant 0 : i32
    return %c0_i32, %c0_i32_0 : i32, i32
  }
  func.func @transform_4(%arg0: i32) -> (i32, i32, i32) {
    %c0_i32 = arith.constant 0 : i32
    %c0_i32_0 = arith.constant 0 : i32
    %c0_i32_1 = arith.constant 0 : i32
    return %arg0, %c0_i32, %c0_i32_0 : i32, i32, i32
  }
}

</mosaic_0001>

<llo_original>
// kernel: mul.8
$region0: #{mul.8}
  #allocation0 [shape = 's32[1]{0}', space=sflag, size = 0x4, scoped, tag = 'scoped memory for mul.8']
  %s0 = inlined_call_operand.vmem [shape: f32[2,16], index: 0, kind: input, shape index: {}, may-alias: {0,1}]
  %s1 = inlined_call_operand.vmem [shape: f32[2,16], index: 1, kind: input, shape index: {}, may-alias: {0,1}]
  %s2 = inlined_call_operand.vmem [shape: f32[2,16], index: 2, kind: output, shape index: {}]
  %v3 = vld [vmem:[%s0] sm:$0x3]
  %v4 = vld [vmem:[%s1] sm:$0x3]
  %5 = xla_tuple %v3, %v4
  %6 = xla_tuple %5
  %v7 = vmul.f32 %v3, %v4
  %8 = xla_tuple %v7
  %9 = vst [vmem:[%s2] sm:$0x3] %v7

// kernel: forward.1
$region0: #{forward.1}
  #allocation0 [shape = 'u32[]', space=smem, size = 0x4, offset = 0x4, fixed_abs, tag = 'smem constant byte address 0x4 - core index']
  #allocation1 [shape = 'u32[144,128]{1,0:T(1,128)}', space=vmem, size = 0x12000, scoped, tag = 'internal scratch']
  %s0 = inlined_call_operand.vmem [shape: f32[2,24,16], index: 0, kind: input, shape index: {}]
  %s1 = inlined_call_operand.vmem [shape: s32[2,1,128], index: 1, kind: input, shape index: {}]
  %s2 = inlined_call_operand.vmem [shape: f32[32,17], index: 2, kind: input, shape index: {}]
  %s3 = inlined_call_operand.vmem [shape: bf16[368,32], index: 3, kind: input, shape index: {}]
  %s4 = inlined_call_operand.vmem [shape: f32[2,32,16], index: 4, kind: output, shape index: {}]
  %s5 = sld [smem:[#allocation0]]
  $region49: #{forward.1} parent=0
    _
  %s7 = ssub.s32 1, %s5
  %s8 = scalar_select 0, %s7, %s5
  loop: start=0, step=1, limit=4
  $region2: #{forward.1} parent=0 // loop_pre_header
    _
  $region3: #{forward.1} parent=0 // loop_header
    %s10 = sphi 0, %s14
    %p11 = scmp.ge.s32.totalorder %s10, 4
    %s20 = sphi 0, %s22
    %s23 = sphi 0, %s20
    %s24 = sphi 0, %s23
    %s40 = sphi 0, %s24
    %s46 = sphi 0, %s48
    %s49 = sphi 0, %s46
    %s50 = sphi 0, %s49
    %s66 = sphi 0, %s50
    %s70 = sphi 0, %s70
    %s72 = sphi 0, %s70
    %s73 = sphi 0, %s72
    %s87 = sphi 0, %s73
    %s91 = sphi 0, %s91
    %s93 = sphi 0, %s91
    %s94 = sphi 0, %s93
    %s108 = sphi 0, %s94
    %s114 = sphi 0, %s116
    %s117 = sphi 0, %s114
    %s118 = sphi 0, %s117
    %s134 = sphi 0, %s118
  $region4: #{forward.1} parent=0 // loop_header_branch
    %13 = sbr.rel (%p11) target = $region8
  $region5: #{forward.1} parent=0 // loop_body
    %s15 = ssub.s32 %s10, 1
    %s16 = ssub.s32 %s10, 2
    %s17 = sadd.s32 %s10, 1
    %s18 = ssub.s32 %s10, %s17
    %p19 = scmp.eq.s32.totalorder %s18, 0
    %s21 = sadd.s32 %s20, 1
    %s22 = scalar_select %p19, %s20, %s21
    %p25 = pneg %p19
    %p26 = scmp.eq.s32.totalorder %s10, 1
    %p27 = por %p25, %p26
    %p28 = scmp.ne.s32.totalorder %s20, %s23
    %p29 = scmp.eq.s32.totalorder %s10, 0
    %p30 = por %p28, %p29
    %p31 = scmp.ne.s32.totalorder %s20, %s23
    %p32 = scmp.eq.s32.totalorder %s15, 1
    %p33 = por %p31, %p32
    %p34 = scmp.ne.s32.totalorder %s23, %s24
    %p35 = scmp.eq.s32.totalorder %s15, 0
    %p36 = por %p34, %p35
    %p37 = scmp.ne.s32.totalorder %s23, %s24
    %p38 = scmp.eq.s32.totalorder %s16, 1
    %p39 = por %p37, %p38
    %p41 = scmp.ne.s32.totalorder %s24, %s40
    %p42 = scmp.eq.s32.totalorder %s16, 0
    %p43 = por %p41, %p42
    %s44 = ssub.s32 %s10, %s17
    %p45 = scmp.eq.s32.totalorder %s44, 0
    %s47 = sadd.s32 %s46, 1
    %s48 = scalar_select %p45, %s46, %s47
    %p51 = pneg %p45
    %p52 = scmp.eq.s32.totalorder %s10, 1
    %p53 = por %p51, %p52
    %p54 = scmp.ne.s32.totalorder %s46, %s49
    %p55 = scmp.eq.s32.totalorder %s10, 0
    %p56 = por %p54, %p55
    %p57 = scmp.ne.s32.totalorder %s46, %s49
    %p58 = scmp.eq.s32.totalorder %s15, 1
    %p59 = por %p57, %p58
    %p60 = scmp.ne.s32.totalorder %s49, %s50
    %p61 = scmp.eq.s32.totalorder %s15, 0
    %p62 = por %p60, %p61
    %p63 = scmp.ne.s32.totalorder %s49, %s50
    %p64 = scmp.eq.s32.totalorder %s16, 1
    %p65 = por %p63, %p64
    %p67 = scmp.ne.s32.totalorder %s50, %s66
    %p68 = scmp.eq.s32.totalorder %s16, 0
    %p69 = por %p67, %p68
    %s71 = sadd.s32 %s70, 1
    %p74 = scmp.eq.s32.totalorder %s10, 1
    %p75 = scmp.ne.s32.totalorder %s70, %s72
    %p76 = scmp.eq.s32.totalorder %s10, 0
    %p77 = por %p75, %p76
    %p78 = scmp.ne.s32.totalorder %s70, %s72
    %p79 = scmp.eq.s32.totalorder %s15, 1
    %p80 = por %p78, %p79
    %p81 = scmp.ne.s32.totalorder %s72, %s73
    %p82 = scmp.eq.s32.totalorder %s15, 0
    %p83 = por %p81, %p82
    %p84 = scmp.ne.s32.totalorder %s72, %s73
    %p85 = scmp.eq.s32.totalorder %s16, 1
    %p86 = por %p84, %p85
    %p88 = scmp.ne.s32.totalorder %s73, %s87
    %p89 = scmp.eq.s32.totalorder %s16, 0
    %p90 = por %p88, %p89
    %s92 = sadd.s32 %s91, 1
    %p95 = scmp.eq.s32.totalorder %s10, 1
    %p96 = scmp.ne.s32.totalorder %s91, %s93
    %p97 = scmp.eq.s32.totalorder %s10, 0
    %p98 = por %p96, %p97
    %p99 = scmp.ne.s32.totalorder %s91, %s93
    %p100 = scmp.eq.s32.totalorder %s15, 1
    %p101 = por %p99, %p100
    %p102 = scmp.ne.s32.totalorder %s93, %s94
    %p103 = scmp.eq.s32.totalorder %s15, 0
    %p104 = por %p102, %p103
    %p105 = scmp.ne.s32.totalorder %s93, %s94
    %p106 = scmp.eq.s32.totalorder %s16, 1
    %p107 = por %p105, %p106
    %p109 = scmp.ne.s32.totalorder %s94, %s108
    %p110 = scmp.eq.s32.totalorder %s16, 0
    %p111 = por %p109, %p110
    %s112 = ssub.s32 %s10, %s17
    %p113 = scmp.eq.s32.totalorder %s112, 0
    %s115 = sadd.s32 %s114, 1
    %s116 = scalar_select %p113, %s114, %s115
    %p119 = pneg %p113
    %p120 = scmp.eq.s32.totalorder %s10, 1
    %p121 = por %p119, %p120
    %p122 = scmp.ne.s32.totalorder %s114, %s117
    %p123 = scmp.eq.s32.totalorder %s10, 0
    %p124 = por %p122, %p123
    %p125 = scmp.ne.s32.totalorder %s114, %s117
    %p126 = scmp.eq.s32.totalorder %s15, 1
    %p127 = por %p125, %p126
    %p128 = scmp.ne.s32.totalorder %s117, %s118
    %p129 = scmp.eq.s32.totalorder %s15, 0
    %p130 = por %p128, %p129
    %p131 = scmp.ne.s32.totalorder %s117, %s118
    %p132 = scmp.eq.s32.totalorder %s16, 1
    %p133 = por %p131, %p132
    %p135 = scmp.ne.s32.totalorder %s118, %s134
    %p136 = scmp.eq.s32.totalorder %s16, 0
    %p137 = por %p135, %p136
    %p138 = scmp.le.s32.totalorder 1, %s10
    %p139 = scmp.lt.s32.totalorder %s10, 3
    %p140 = pnand %p138, %p139
    %p141 = pneg %p140
    // Predicated region
    $region9: #{forward.1} parent=5 // pred_check
      _
    $region10: #{forward.1} parent=5 // pred_check_branch
      %143 = sbr.rel (%p140) target = $region12
    $region11: #{forward.1} parent=5 // pred_region
      %s144 = ssub.s32 %s10, 1
      // Predicated region
      $region13: #{forward.1} parent=11 // pred_check
        %p145 = pneg %p83
      $region14: #{forward.1} parent=11 // pred_check_branch
        %147 = sbr.rel (%p145) target = $region16
      $region15: #{forward.1} parent=11 // pred_region
        _
      $region16: #{forward.1} parent=11 // pred_fallthru
        _
      // Predicated region
      $region17: #{forward.1} parent=11 // pred_check
        %p148 = pneg %p104
      $region18: #{forward.1} parent=11 // pred_check_branch
        %150 = sbr.rel (%p148) target = $region20
      $region19: #{forward.1} parent=11 // pred_region
        _
      $region20: #{forward.1} parent=11 // pred_fallthru
        _
    $region12: #{forward.1} parent=5 // pred_fallthru
      _
    %p151 = scmp.lt.s32.totalorder %s10, 2
    // Predicated region
    $region21: #{forward.1} parent=5 // pred_check
      %p152 = pneg %p151
    $region22: #{forward.1} parent=5 // pred_check_branch
      %154 = sbr.rel (%p152) target = $region24
    $region23: #{forward.1} parent=5 // pred_region
      // Predicated region
      $region25: #{forward.1} parent=23 // pred_check
        %p155 = pneg %p30
      $region26: #{forward.1} parent=23 // pred_check_branch
        %157 = sbr.rel (%p155) target = $region28
      $region27: #{forward.1} parent=23 // pred_region
        %p158 = scmp.lt.s32.totalorder %s10, 1
        %s159 = scalar_select %p158, %s10, 1
        %s160 = smul.addr %s159, 3
        %s161 = smul.addr %s160, 8
        %s162 = scalar_lea.vmem %s0, %s161
      $region28: #{forward.1} parent=23 // pred_fallthru
        _
      // Predicated region
      $region29: #{forward.1} parent=23 // pred_check
        %p163 = pneg %p56
      $region30: #{forward.1} parent=23 // pred_check_branch
        %165 = sbr.rel (%p163) target = $region32
      $region31: #{forward.1} parent=23 // pred_region
        %p166 = scmp.lt.s32.totalorder %s10, 1
        %s167 = scalar_select %p166, %s10, 1
        %s168 = scalar_lea.vmem %s1, %s167
      $region32: #{forward.1} parent=23 // pred_fallthru
        _
    $region24: #{forward.1} parent=5 // pred_fallthru
      _
    %p169 = scmp.le.s32.totalorder 1, %s10
    %p170 = scmp.lt.s32.totalorder %s10, 3
    %p171 = pnand %p169, %p170
    %p172 = pneg %p171
    // Predicated region
    $region33: #{forward.1} parent=5 // pred_check
      _
    $region34: #{forward.1} parent=5 // pred_check_branch
      %174 = sbr.rel (%p171) target = $region36
    $region35: #{forward.1} parent=5 // pred_region
      %s175 = ssub.s32 %s10, 1
      %p176 = scmp.lt.s32.totalorder %s15, 1
      %s177 = scalar_select %p176, %s15, 1
      %s178 = smul.addr %s177, 3
      %s179 = smul.addr %s178, 8
      %s180 = scalar_lea.vmem %s0, %s179
      %p181 = pneg %p36
      %p182 = pneg %p33
      %p183 = scmp.lt.s32.totalorder %s15, 1
      %s184 = scalar_select %p183, %s15, 1
      %s185 = scalar_lea.vmem %s1, %s184
      %p186 = pneg %p62
      %p187 = pneg %p59
      %p188 = pneg %p83
      %p189 = pneg %p80
      %p190 = pneg %p104
      %p191 = pneg %p101
      %p192 = pneg %p130
      %p193 = pneg %p127
      %p194 = scmp.lt.s32.totalorder %s15, 1
      %s195 = scalar_select %p194, %s15, 1
      %s196 = smul.addr %s195, 4
      %s197 = smul.addr %s196, 8
      %s198 = scalar_lea.vmem %s4, %s197
      %p199 = scmp.lt.s32.totalorder %s15, 1
      %s200 = scalar_select %p199, %s15, 1
      %s201 = smul.addr %s200, 3
      %s202 = smul.addr %s201, 8
      %s203 = scalar_lea.vmem %s0, %s202
      %p204 = scmp.lt.s32.totalorder %s15, 1
      %s205 = scalar_select %p204, %s15, 1
      %s206 = scalar_lea.vmem %s1, %s205
      %p207 = scmp.lt.s32.totalorder %s15, 1
      %s208 = scalar_select %p207, %s15, 1
      %s209 = smul.addr %s208, 4
      %s210 = smul.addr %s209, 8
      %s211 = scalar_lea.vmem %s4, %s210
      %v213 = vld [vmem:[%s203] sm:$0xff]
      %v214 = vld [vmem:[%s203 + $0x8] sm:$0xff]
      %v215 = vld [vmem:[%s203 + $0x10] sm:$0x1]
      %v216 = vld [vmem:[%s206] sm:$0x1]
      %v217 = vlaneseq
      %v218 = vshrl.u32 %v217, 7
      %v219 = vadd.s32 %v218, 8
      %v220 = vlaneseq
      %v221 = vand.u32 %v220, 127
      %v222 = vmul.u32 %v218, 8
      %v223 = vmul.u32 %v219, 8
      %vm224 = vcmp.ge.s32.totalorder %v221, %v222
      %vm225 = vcmp.ge.s32.totalorder %v221, %v223
      %v226 = vadd.s32 %v222, 8
      %v227 = vadd.s32 %v223, 8
      %vm228 = vcmp.lt.s32.totalorder %v221, %v226
      %vm229 = vcmp.lt.s32.totalorder %v221, %v227
      %vm230 = vmand %vm224, %vm228
      %vm231 = vmand %vm225, %vm229
      %v232 = vsel %vm230, 1.0, 0.0
      %v233 = vsel %vm231, 1.0, 0.0
      %v234 = vlaneseq
      %v235 = vshrl.u32 %v234, 7
      %v236 = vsub.s32 0, %v235
      %v237 = vrot.slane %v216, %v236
      %vm238 = vcmp.eq.s32.totalorder %v218, %v237
      %vm239 = vcmp.eq.s32.totalorder %v219, %v237
      %v240 = vsel %vm238, 1.0, 0.0
      %v241 = vsel %vm239, 1.0, 0.0
      %v242 = vld [vmem:[%s3] sm:$0xf]
      %v243 = vld [vmem:[%s3 + $0x4] sm:$0xf]
      %v244 = vld [vmem:[%s2] sm:$0xff]
      %246 = vset.pattern.permute.xlu0 0
      %247 = vperm.xlu0 %246, %v244
      %v248 = vpop.permute.xlu0 %247
      %v250 = vmul.f32 %v213, %v248
      %251 = vset.pattern.permute.xlu0 1
      %252 = vperm.xlu0 %251, %v244
      %v253 = vpop.permute.xlu0 %252
      %v255 = vadd.f32 %v250, %v253
      %v256 = vmax.f32 %v255, 0.0
      %v257 = vpack.c.bf16 %v256, %v256
      %v260 = vunpack.c.l.b16 %v242
      %v261 = vunpack.c.l.b16 %v243
      %v262 = vpack.c.b16 %v261, %v260
      %vm263 = vcmask 64512
      %v265 = vsel %vm263, %v262, 0
      %vm267 = vcmask 1043456
      %v269 = vsel %vm267, %v257, 0
      %271 = vmatprep.subr.bf16.mxu0 0
      %272 = vmatpush1.bf16.msra.mxu0 0
      %273 = vmatprep.subr.bf16.mxu0 0
      %274 = vmatpush1.bf16.msra.mxu0 0
      %275 = vmatprep.subr.bf16.mxu0 0
      %276 = vmatpush1.bf16.msra.mxu0 0
      %277 = vmatprep.subr.bf16.mxu0 0
      %278 = vmatpush1.bf16.msra.mxu0 0
      %279 = vmatprep.subr.bf16.mxu0 0
      %280 = vmatpush1.bf16.msra.mxu0 0
      %281 = vmatprep.subr.bf16.mxu0 0
      %282 = vmatpush1.bf16.msra.mxu0 0
      %283 = vmatprep.subr.bf16.mxu0 0
      %284 = vmatpush1.bf16.msra.mxu0 0
      %285 = vmatprep.subr.bf16.mxu0 0
      %286 = vmatpush1.bf16.msra.mxu0 %v269
      %287 = vmatprep.subr.bf16.mxu0 0
      %288 = vmatpush2.bf16.msra.mxu0 0
      %289 = vmatprep.subr.bf16.mxu0 0
      %290 = vmatpush2.bf16.msra.mxu0 0
      %291 = vmatprep.subr.bf16.mxu0 0
      %292 = vmatpush2.bf16.msra.mxu0 0
      %293 = vmatprep.subr.bf16.mxu0 0
      %294 = vmatpush2.bf16.msra.mxu0 0
      %295 = vmatprep.subr.bf16.mxu0 0
      %296 = vmatpush2.bf16.msra.mxu0 0
      %297 = vmatprep.subr.bf16.mxu0 0
      %298 = vmatpush2.bf16.msra.mxu0 0
      %299 = vmatprep.subr.bf16.mxu0 0
      %300 = vmatpush2.bf16.msra.mxu0 0
      %301 = vmatprep.subr.bf16.mxu0 0
      %302 = vmatpush2.bf16.msra.mxu0 0
      %303 = vmatprep.mubr.bf16.mxu0 0
      %304 = vmatmul.mubr.bf16.gmra.mxu0 %v265
      %v305 = vpop.f32.mrf.mxu0
      %v306 = vadd.f32 0.0, %v305
      %v307 = vpop.f32.mrf.mxu0
      %v308 = vpop.f32.mrf.mxu0
      %v309 = vadd.f32 0.0, %v308
      %v310 = vpop.f32.mrf.mxu0
      %311 = vdwg.mxu0
      %v312 = vld [vmem:[%s3 + $0x8] sm:$0xf]
      %v313 = vld [vmem:[%s3 + $0xc] sm:$0xf]
      %v314 = vld [vmem:[%s3 + $0x10] sm:$0xf]
      %v315 = vld [vmem:[%s3 + $0x14] sm:$0xf]
      %v316 = vld [vmem:[%s2] sm:$0xff]
      %v317 = vld [vmem:[%s2 + $0x8] sm:$0xff]
      %319 = vset.pattern.permute.xlu0 2
      %320 = vperm.xlu0 %319, %v316
      %v321 = vpop.permute.xlu0 %320
      %324 = vset.pattern.permute.xlu0 2
      %325 = vperm.xlu0 %324, %v317
      %v326 = vpop.permute.xlu0 %325
      %v328 = vmul.f32 %v306, %v321
      %v329 = vmul.f32 %v309, %v326
      %330 = vset.pattern.permute.xlu0 3
      %331 = vperm.xlu0 %330, %v316
      %v332 = vpop.permute.xlu0 %331
      %334 = vset.pattern.permute.xlu0 3
      %335 = vperm.xlu0 %334, %v317
      %v336 = vpop.permute.xlu0 %335
      %v338 = vadd.f32 %v328, %v332
      %v339 = vadd.f32 %v329, %v336
      %v340 = vmax.f32 %v338, 0.0
      %v341 = vmax.f32 %v339, 0.0
      %v342 = vpack.c.bf16 %v341, %v340
      %v347 = vunpack.c.l.b16 %v312
      %v348 = vunpack.c.l.b16 %v313
      %v349 = vunpack.c.l.b16 %v314
      %v350 = vunpack.c.l.b16 %v315
      %v351 = vpack.c.b16 %v348, %v347
      %v352 = vpack.c.b16 %v350, %v349
      %vm353 = vcmask 130048
      %v355 = vsel %vm353, %v351, 0
      %v358 = vsel %vm353, %v352, 0
      %360 = vmatprep.subr.bf16.mxu0 0
      %361 = vmatpush1.bf16.msra.mxu0 0
      %362 = vmatprep.subr.bf16.mxu0 0
      %363 = vmatpush1.bf16.msra.mxu0 0
      %364 = vmatprep.subr.bf16.mxu0 0
      %365 = vmatpush1.bf16.msra.mxu0 0
      %366 = vmatprep.subr.bf16.mxu0 0
      %367 = vmatpush1.bf16.msra.mxu0 0
      %368 = vmatprep.subr.bf16.mxu0 0
      %369 = vmatpush1.bf16.msra.mxu0 0
      %370 = vmatprep.subr.bf16.mxu0 0
      %371 = vmatpush1.bf16.msra.mxu0 0
      %372 = vmatprep.subr.bf16.mxu0 0
      %373 = vmatpush1.bf16.msra.mxu0 0
      %374 = vmatprep.subr.bf16.mxu0 0
      %375 = vmatpush1.bf16.msra.mxu0 %v342
      %376 = vmatprep.subr.bf16.mxu0 0
      %377 = vmatpush2.bf16.msra.mxu0 0
      %378 = vmatprep.subr.bf16.mxu0 0
      %379 = vmatpush2.bf16.msra.mxu0 0
      %380 = vmatprep.subr.bf16.mxu0 0
      %381 = vmatpush2.bf16.msra.mxu0 0
      %382 = vmatprep.subr.bf16.mxu0 0
      %383 = vmatpush2.bf16.msra.mxu0 0
      %384 = vmatprep.subr.bf16.mxu0 0
      %385 = vmatpush2.bf16.msra.mxu0 0
      %386 = vmatprep.subr.bf16.mxu0 0
      %387 = vmatpush2.bf16.msra.mxu0 0
      %388 = vmatprep.subr.bf16.mxu0 0
      %389 = vmatpush2.bf16.msra.mxu0 0
      %390 = vmatprep.subr.bf16.mxu0 0
      %391 = vmatpush2.bf16.msra.mxu0 0
      %392 = vmatprep.mubr.bf16.mxu0 0
      %393 = vmatmul.mubr.bf16.gmra.mxu0 %v355
      %v394 = vpop.f32.mrf.mxu0
      %v395 = vadd.f32 0.0, %v394
      %v396 = vpop.f32.mrf.mxu0
      %v397 = vpop.f32.mrf.mxu0
      %v398 = vadd.f32 0.0, %v397
      %v399 = vpop.f32.mrf.mxu0
      %400 = vmatprep.mubr.bf16.mxu0 0
      %401 = vmatmul.mubr.bf16.gmra.mxu0 %v358
      %v402 = vpop.f32.mrf.mxu0
      %v403 = vadd.f32 0.0, %v402
      %v404 = vpop.f32.mrf.mxu0
      %v405 = vpop.f32.mrf.mxu0
      %v406 = vadd.f32 0.0, %v405
      %v407 = vpop.f32.mrf.mxu0
      %408 = vdwg.mxu0
      %v409 = vld [vmem:[%s3 + $0x18] sm:$0xf]
      %v410 = vld [vmem:[%s3 + $0x1c] sm:$0xf]
      %v411 = vld [vmem:[%s3 + $0x20] sm:$0xf]
      %v412 = vld [vmem:[%s3 + $0x24] sm:$0xf]
      %413 = vset.pattern.permute.xlu0 4
      %414 = vperm.xlu0 %413, %v316
      %v415 = vpop.permute.xlu0 %414
      %417 = vset.pattern.permute.xlu0 4
      %418 = vperm.xlu0 %417, %v317
      %v419 = vpop.permute.xlu0 %418
      %v421 = vmul.f32 %v306, %v415
      %v422 = vmul.f32 %v309, %v419
      %423 = vset.pattern.permute.xlu0 5
      %424 = vperm.xlu0 %423, %v316
      %v425 = vpop.permute.xlu0 %424
      %427 = vset.pattern.permute.xlu0 5
      %428 = vperm.xlu0 %427, %v317
      %v429 = vpop.permute.xlu0 %428
      %v431 = vadd.f32 %v421, %v425
      %v432 = vadd.f32 %v422, %v429
      %v433 = vmax.f32 %v431, 0.0
      %v434 = vmax.f32 %v432, 0.0
      %v435 = vpack.c.bf16 %v434, %v433
      %v440 = vunpack.c.l.b16 %v409
      %v441 = vunpack.c.l.b16 %v410
      %v442 = vunpack.c.l.b16 %v411
      %v443 = vunpack.c.l.b16 %v412
      %v444 = vpack.c.b16 %v441, %v440
      %v445 = vpack.c.b16 %v443, %v442
      %v447 = vsel %vm353, %v444, 0
      %v450 = vsel %vm353, %v445, 0
      %452 = vmatprep.subr.bf16.mxu0 0
      %453 = vmatpush1.bf16.msra.mxu0 0
      %454 = vmatprep.subr.bf16.mxu0 0
      %455 = vmatpush1.bf16.msra.mxu0 0
      %456 = vmatprep.subr.bf16.mxu0 0
      %457 = vmatpush1.bf16.msra.mxu0 0
      %458 = vmatprep.subr.bf16.mxu0 0
      %459 = vmatpush1.bf16.msra.mxu0 0
      %460 = vmatprep.subr.bf16.mxu0 0
      %461 = vmatpush1.bf16.msra.mxu0 0
      %462 = vmatprep.subr.bf16.mxu0 0
      %463 = vmatpush1.bf16.msra.mxu0 0
      %464 = vmatprep.subr.bf16.mxu0 0
      %465 = vmatpush1.bf16.msra.mxu0 0
      %466 = vmatprep.subr.bf16.mxu0 0
      %467 = vmatpush1.bf16.msra.mxu0 %v435
      %468 = vmatprep.subr.bf16.mxu0 0
      %469 = vmatpush2.bf16.msra.mxu0 0
      %470 = vmatprep.subr.bf16.mxu0 0
      %471 = vmatpush2.bf16.msra.mxu0 0
      %472 = vmatprep.subr.bf16.mxu0 0
      %473 = vmatpush2.bf16.msra.mxu0 0
      %474 = vmatprep.subr.bf16.mxu0 0
      %475 = vmatpush2.bf16.msra.mxu0 0
      %476 = vmatprep.subr.bf16.mxu0 0
      %477 = vmatpush2.bf16.msra.mxu0 0
      %478 = vmatprep.subr.bf16.mxu0 0
      %479 = vmatpush2.bf16.msra.mxu0 0
      %480 = vmatprep.subr.bf16.mxu0 0
      %481 = vmatpush2.bf16.msra.mxu0 0
      %482 = vmatprep.subr.bf16.mxu0 0
      %483 = vmatpush2.bf16.msra.mxu0 0
      %484 = vmatprep.mubr.bf16.mxu0 0
      %485 = vmatmul.mubr.bf16.gmra.mxu0 %v447
      %v486 = vpop.f32.mrf.mxu0
      %v487 = vadd.f32 0.0, %v486
      %v488 = vpop.f32.mrf.mxu0
      %v489 = vpop.f32.mrf.mxu0
      %v490 = vadd.f32 0.0, %v489
      %v491 = vpop.f32.mrf.mxu0
      %492 = vmatprep.mubr.bf16.mxu0 0
      %493 = vmatmul.mubr.bf16.gmra.mxu0 %v450
      %v494 = vpop.f32.mrf.mxu0
      %v495 = vadd.f32 0.0, %v494
      %v496 = vpop.f32.mrf.mxu0
      %v497 = vpop.f32.mrf.mxu0
      %v498 = vadd.f32 0.0, %v497
      %v499 = vpop.f32.mrf.mxu0
      %500 = vdwg.mxu0
      %v502 = vsel %vm353, %v214, 0
      %504 = vmatprep.subr.mxu0 0.0
      %505 = vmatpush1.msra.mxu0 0.0
      %506 = vmatprep.subr.mxu0 0.0
      %507 = vmatpush1.msra.mxu0 0.0
      %508 = vmatprep.subr.mxu0 0.0
      %509 = vmatpush1.msra.mxu0 0.0
      %510 = vmatprep.subr.mxu0 0.0
      %511 = vmatpush1.msra.mxu0 0.0
      %512 = vmatprep.subr.mxu0 0.0
      %513 = vmatpush1.msra.mxu0 0.0
      %514 = vmatprep.subr.mxu0 0.0
      %515 = vmatpush1.msra.mxu0 0.0
      %516 = vmatprep.subr.mxu0 0.0
      %517 = vmatpush1.msra.mxu0 0.0
      %518 = vmatprep.subr.mxu0 0.0
      %519 = vmatpush1.msra.mxu0 0.0
      %520 = vmatprep.subr.mxu0 0.0
      %521 = vmatpush1.msra.mxu0 0.0
      %522 = vmatprep.subr.mxu0 0.0
      %523 = vmatpush1.msra.mxu0 0.0
      %524 = vmatprep.subr.mxu0 0.0
      %525 = vmatpush1.msra.mxu0 0.0
      %526 = vmatprep.subr.mxu0 0.0
      %527 = vmatpush1.msra.mxu0 0.0
      %528 = vmatprep.subr.mxu0 0.0
      %529 = vmatpush1.msra.mxu0 0.0
      %530 = vmatprep.subr.mxu0 0.0
      %531 = vmatpush1.msra.mxu0 0.0
      %532 = vmatprep.subr.mxu0 0.0
      %533 = vmatpush1.msra.mxu0 %v233
      %534 = vmatprep.subr.mxu0 0.0
      %535 = vmatpush1.msra.mxu0 %v232
      %536 = vmatprep.subr.mxu0 0.0
      %537 = vmatpush2.msra.mxu0 0.0
      %538 = vmatprep.subr.mxu0 0.0
      %539 = vmatpush2.msra.mxu0 0.0
      %540 = vmatprep.subr.mxu0 0.0
      %541 = vmatpush2.msra.mxu0 0.0
      %542 = vmatprep.subr.mxu0 0.0
      %543 = vmatpush2.msra.mxu0 0.0
      %544 = vmatprep.subr.mxu0 0.0
      %545 = vmatpush2.msra.mxu0 0.0
      %546 = vmatprep.subr.mxu0 0.0
      %547 = vmatpush2.msra.mxu0 0.0
      %548 = vmatprep.subr.mxu0 0.0
      %549 = vmatpush2.msra.mxu0 0.0
      %550 = vmatprep.subr.mxu0 0.0
      %551 = vmatpush2.msra.mxu0 0.0
      %552 = vmatprep.subr.mxu0 0.0
      %553 = vmatpush2.msra.mxu0 0.0
      %554 = vmatprep.subr.mxu0 0.0
      %555 = vmatpush2.msra.mxu0 0.0
      %556 = vmatprep.subr.mxu0 0.0
      %557 = vmatpush2.msra.mxu0 0.0
      %558 = vmatprep.subr.mxu0 0.0
      %559 = vmatpush2.msra.mxu0 0.0
      %560 = vmatprep.subr.mxu0 0.0
      %561 = vmatpush2.msra.mxu0 0.0
      %562 = vmatprep.subr.mxu0 0.0
      %563 = vmatpush2.msra.mxu0 0.0
      %564 = vmatprep.subr.mxu0 0.0
      %565 = vmatpush2.msra.mxu0 0.0
      %566 = vmatprep.subr.mxu0 0.0
      %567 = vmatpush2.msra.mxu0 0.0
      %568 = vmatprep.mubr.f32.mxu0 0.0
      %569 = vmatmul.mubr.f32.gmra.mxu0 %v502
      %v570 = vpop.f32.mrf.mxu0
      %v571 = vadd.f32 0.0, %v570
      %v572 = vpop.f32.mrf.mxu0
      %573 = vdwg.mxu0
      %574 = vmatprep.subr.mxu0 0.0
      %575 = vmatpush1.msra.mxu0 0.0
      %576 = vmatprep.subr.mxu0 0.0
      %577 = vmatpush1.msra.mxu0 0.0
      %578 = vmatprep.subr.mxu0 0.0
      %579 = vmatpush1.msra.mxu0 0.0
      %580 = vmatprep.subr.mxu0 0.0
      %581 = vmatpush1.msra.mxu0 0.0
      %582 = vmatprep.subr.mxu0 0.0
      %583 = vmatpush1.msra.mxu0 0.0
      %584 = vmatprep.subr.mxu0 0.0
      %585 = vmatpush1.msra.mxu0 0.0
      %586 = vmatprep.subr.mxu0 0.0
      %587 = vmatpush1.msra.mxu0 0.0
      %588 = vmatprep.subr.mxu0 0.0
      %589 = vmatpush1.msra.mxu0 0.0
      %590 = vmatprep.subr.mxu0 0.0
      %591 = vmatpush1.msra.mxu0 0.0
      %592 = vmatprep.subr.mxu0 0.0
      %593 = vmatpush1.msra.mxu0 0.0
      %594 = vmatprep.subr.mxu0 0.0
      %595 = vmatpush1.msra.mxu0 0.0
      %596 = vmatprep.subr.mxu0 0.0
      %597 = vmatpush1.msra.mxu0 0.0
      %598 = vmatprep.subr.mxu0 0.0
      %599 = vmatpush1.msra.mxu0 0.0
      %600 = vmatprep.subr.mxu0 0.0
      %601 = vmatpush1.msra.mxu0 0.0
      %602 = vmatprep.subr.mxu0 0.0
      %603 = vmatpush1.msra.mxu0 %v241
      %604 = vmatprep.subr.mxu0 0.0
      %605 = vmatpush1.msra.mxu0 %v240
      %606 = vmatprep.subr.mxu0 0.0
      %607 = vmatpush2.msra.mxu0 0.0
      %608 = vmatprep.subr.mxu0 0.0
      %609 = vmatpush2.msra.mxu0 0.0
      %610 = vmatprep.subr.mxu0 0.0
      %611 = vmatpush2.msra.mxu0 0.0
      %612 = vmatprep.subr.mxu0 0.0
      %613 = vmatpush2.msra.mxu0 0.0
      %614 = vmatprep.subr.mxu0 0.0
      %615 = vmatpush2.msra.mxu0 0.0
      %616 = vmatprep.subr.mxu0 0.0
      %617 = vmatpush2.msra.mxu0 0.0
      %618 = vmatprep.subr.mxu0 0.0
      %619 = vmatpush2.msra.mxu0 0.0
      %620 = vmatprep.subr.mxu0 0.0
      %621 = vmatpush2.msra.mxu0 0.0
      %622 = vmatprep.subr.mxu0 0.0
      %623 = vmatpush2.msra.mxu0 0.0
      %624 = vmatprep.subr.mxu0 0.0
      %625 = vmatpush2.msra.mxu0 0.0
      %626 = vmatprep.subr.mxu0 0.0
      %627 = vmatpush2.msra.mxu0 0.0
      %628 = vmatprep.subr.mxu0 0.0
      %629 = vmatpush2.msra.mxu0 0.0
      %630 = vmatprep.subr.mxu0 0.0
      %631 = vmatpush2.msra.mxu0 0.0
      %632 = vmatprep.subr.mxu0 0.0
      %633 = vmatpush2.msra.mxu0 0.0
      %634 = vmatprep.subr.mxu0 0.0
      %635 = vmatpush2.msra.mxu0 0.0
      %636 = vmatprep.subr.mxu0 0.0
      %637 = vmatpush2.msra.mxu0 0.0
      %638 = vmatprep.mubr.f32.mxu0 0.0
      %639 = vmatmul.mubr.f32.gmra.mxu0 %v502
      %v640 = vpop.f32.mrf.mxu0
      %v641 = vadd.f32 0.0, %v640
      %v642 = vpop.f32.mrf.mxu0
      %643 = vdwg.mxu0
      %v645 = vsel %vm353, %v487, 0
      %v648 = vsel %vm353, %v490, 0
      %v651 = vsel %vm353, %v495, 0
      %v654 = vsel %vm353, %v498, 0
      %656 = vmatprep.subr.mxu0 0.0
      %657 = vmatpush1.msra.mxu0 0.0
      %658 = vmatprep.subr.mxu0 0.0
      %659 = vmatpush1.msra.mxu0 0.0
      %660 = vmatprep.subr.mxu0 0.0
      %661 = vmatpush1.msra.mxu0 0.0
      %662 = vmatprep.subr.mxu0 0.0
      %663 = vmatpush1.msra.mxu0 0.0
      %664 = vmatprep.subr.mxu0 0.0
      %665 = vmatpush1.msra.mxu0 0.0
      %666 = vmatprep.subr.mxu0 0.0
      %667 = vmatpush1.msra.mxu0 0.0
      %668 = vmatprep.subr.mxu0 0.0
      %669 = vmatpush1.msra.mxu0 0.0
      %670 = vmatprep.subr.mxu0 0.0
      %671 = vmatpush1.msra.mxu0 0.0
      %672 = vmatprep.subr.mxu0 0.0
      %673 = vmatpush1.msra.mxu0 0.0
      %674 = vmatprep.subr.mxu0 0.0
      %675 = vmatpush1.msra.mxu0 0.0
      %676 = vmatprep.subr.mxu0 0.0
      %677 = vmatpush1.msra.mxu0 0.0
      %678 = vmatprep.subr.mxu0 0.0
      %679 = vmatpush1.msra.mxu0 0.0
      %680 = vmatprep.subr.mxu0 0.0
      %681 = vmatpush1.msra.mxu0 0.0
      %682 = vmatprep.subr.mxu0 0.0
      %683 = vmatpush1.msra.mxu0 0.0
      %684 = vmatprep.subr.mxu0 0.0
      %685 = vmatpush1.msra.mxu0 %v241
      %686 = vmatprep.subr.mxu0 0.0
      %687 = vmatpush1.msra.mxu0 %v240
      %688 = vmatprep.subr.mxu0 0.0
      %689 = vmatpush2.msra.mxu0 0.0
      %690 = vmatprep.subr.mxu0 0.0
      %691 = vmatpush2.msra.mxu0 0.0
      %692 = vmatprep.subr.mxu0 0.0
      %693 = vmatpush2.msra.mxu0 0.0
      %694 = vmatprep.subr.mxu0 0.0
      %695 = vmatpush2.msra.mxu0 0.0
      %696 = vmatprep.subr.mxu0 0.0
      %697 = vmatpush2.msra.mxu0 0.0
      %698 = vmatprep.subr.mxu0 0.0
      %699 = vmatpush2.msra.mxu0 0.0
      %700 = vmatprep.subr.mxu0 0.0
      %701 = vmatpush2.msra.mxu0 0.0
      %702 = vmatprep.subr.mxu0 0.0
      %703 = vmatpush2.msra.mxu0 0.0
      %704 = vmatprep.subr.mxu0 0.0
      %705 = vmatpush2.msra.mxu0 0.0
      %706 = vmatprep.subr.mxu0 0.0
      %707 = vmatpush2.msra.mxu0 0.0
      %708 = vmatprep.subr.mxu0 0.0
      %709 = vmatpush2.msra.mxu0 0.0
      %710 = vmatprep.subr.mxu0 0.0
      %711 = vmatpush2.msra.mxu0 0.0
      %712 = vmatprep.subr.mxu0 0.0
      %713 = vmatpush2.msra.mxu0 0.0
      %714 = vmatprep.subr.mxu0 0.0
      %715 = vmatpush2.msra.mxu0 0.0
      %716 = vmatprep.subr.mxu0 0.0
      %717 = vmatpush2.msra.mxu0 0.0
      %718 = vmatprep.subr.mxu0 0.0
      %719 = vmatpush2.msra.mxu0 0.0
      %720 = vmatprep.mubr.f32.mxu0 0.0
      %721 = vmatmul.mubr.f32.gmra.mxu0 %v645
      %v722 = vpop.f32.mrf.mxu0
      %v723 = vadd.f32 0.0, %v722
      %v724 = vpop.f32.mrf.mxu0
      %725 = vmatprep.mubr.f32.mxu0 0.0
      %726 = vmatmul.mubr.f32.gmra.mxu0 %v648
      %v727 = vpop.f32.mrf.mxu0
      %v728 = vadd.f32 0.0, %v727
      %v729 = vpop.f32.mrf.mxu0
      %730 = vmatprep.mubr.f32.mxu0 0.0
      %731 = vmatmul.mubr.f32.gmra.mxu0 %v651
      %v732 = vpop.f32.mrf.mxu0
      %v733 = vadd.f32 0.0, %v732
      %v734 = vpop.f32.mrf.mxu0
      %735 = vmatprep.mubr.f32.mxu0 0.0
      %736 = vmatmul.mubr.f32.gmra.mxu0 %v654
      %v737 = vpop.f32.mrf.mxu0
      %v738 = vadd.f32 0.0, %v737
      %v739 = vpop.f32.mrf.mxu0
      %740 = vdwg.mxu0
      %v742 = vsel %vm353, %v215, 0
      %744 = vmatprep.subr.mxu0 0.0
      %745 = vmatpush1.msra.mxu0 0.0
      %746 = vmatprep.subr.mxu0 0.0
      %747 = vmatpush1.msra.mxu0 0.0
      %748 = vmatprep.subr.mxu0 0.0
      %749 = vmatpush1.msra.mxu0 0.0
      %750 = vmatprep.subr.mxu0 0.0
      %751 = vmatpush1.msra.mxu0 0.0
      %752 = vmatprep.subr.mxu0 0.0
      %753 = vmatpush1.msra.mxu0 0.0
      %754 = vmatprep.subr.mxu0 0.0
      %755 = vmatpush1.msra.mxu0 0.0
      %756 = vmatprep.subr.mxu0 0.0
      %757 = vmatpush1.msra.mxu0 0.0
      %758 = vmatprep.subr.mxu0 0.0
      %759 = vmatpush1.msra.mxu0 0.0
      %760 = vmatprep.subr.mxu0 0.0
      %761 = vmatpush1.msra.mxu0 0.0
      %762 = vmatprep.subr.mxu0 0.0
      %763 = vmatpush1.msra.mxu0 0.0
      %764 = vmatprep.subr.mxu0 0.0
      %765 = vmatpush1.msra.mxu0 0.0
      %766 = vmatprep.subr.mxu0 0.0
      %767 = vmatpush1.msra.mxu0 0.0
      %768 = vmatprep.subr.mxu0 0.0
      %769 = vmatpush1.msra.mxu0 0.0
      %770 = vmatprep.subr.mxu0 0.0
      %771 = vmatpush1.msra.mxu0 0.0
      %772 = vmatprep.subr.mxu0 0.0
      %773 = vmatpush1.msra.mxu0 %v233
      %774 = vmatprep.subr.mxu0 0.0
      %775 = vmatpush1.msra.mxu0 %v232
      %776 = vmatprep.subr.mxu0 0.0
      %777 = vmatpush2.msra.mxu0 0.0
      %778 = vmatprep.subr.mxu0 0.0
      %779 = vmatpush2.msra.mxu0 0.0
      %780 = vmatprep.subr.mxu0 0.0
      %781 = vmatpush2.msra.mxu0 0.0
      %782 = vmatprep.subr.mxu0 0.0
      %783 = vmatpush2.msra.mxu0 0.0
      %784 = vmatprep.subr.mxu0 0.0
      %785 = vmatpush2.msra.mxu0 0.0
      %786 = vmatprep.subr.mxu0 0.0
      %787 = vmatpush2.msra.mxu0 0.0
      %788 = vmatprep.subr.mxu0 0.0
      %789 = vmatpush2.msra.mxu0 0.0
      %790 = vmatprep.subr.mxu0 0.0
      %791 = vmatpush2.msra.mxu0 0.0
      %792 = vmatprep.subr.mxu0 0.0
      %793 = vmatpush2.msra.mxu0 0.0
      %794 = vmatprep.subr.mxu0 0.0
      %795 = vmatpush2.msra.mxu0 0.0
      %796 = vmatprep.subr.mxu0 0.0
      %797 = vmatpush2.msra.mxu0 0.0
      %798 = vmatprep.subr.mxu0 0.0
      %799 = vmatpush2.msra.mxu0 0.0
      %800 = vmatprep.subr.mxu0 0.0
      %801 = vmatpush2.msra.mxu0 0.0
      %802 = vmatprep.subr.mxu0 0.0
      %803 = vmatpush2.msra.mxu0 0.0
      %804 = vmatprep.subr.mxu0 0.0
      %805 = vmatpush2.msra.mxu0 0.0
      %806 = vmatprep.subr.mxu0 0.0
      %807 = vmatpush2.msra.mxu0 0.0
      %808 = vmatprep.mubr.f32.mxu0 0.0
      %809 = vmatmul.mubr.f32.gmra.mxu0 %v742
      %v810 = vpop.f32.mrf.mxu0
      %v811 = vadd.f32 0.0, %v810
      %v812 = vpop.f32.mrf.mxu0
      %813 = vdwg.mxu0
      %814 = vmatprep.subr.mxu0 0.0
      %815 = vmatpush1.msra.mxu0 0.0
      %816 = vmatprep.subr.mxu0 0.0
      %817 = vmatpush1.msra.mxu0 0.0
      %818 = vmatprep.subr.mxu0 0.0
      %819 = vmatpush1.msra.mxu0 0.0
      %820 = vmatprep.subr.mxu0 0.0
      %821 = vmatpush1.msra.mxu0 0.0
      %822 = vmatprep.subr.mxu0 0.0
      %823 = vmatpush1.msra.mxu0 0.0
      %824 = vmatprep.subr.mxu0 0.0
      %825 = vmatpush1.msra.mxu0 0.0
      %826 = vmatprep.subr.mxu0 0.0
      %827 = vmatpush1.msra.mxu0 0.0
      %828 = vmatprep.subr.mxu0 0.0
      %829 = vmatpush1.msra.mxu0 0.0
      %830 = vmatprep.subr.mxu0 0.0
      %831 = vmatpush1.msra.mxu0 0.0
      %832 = vmatprep.subr.mxu0 0.0
      %833 = vmatpush1.msra.mxu0 0.0
      %834 = vmatprep.subr.mxu0 0.0
      %835 = vmatpush1.msra.mxu0 0.0
      %836 = vmatprep.subr.mxu0 0.0
      %837 = vmatpush1.msra.mxu0 0.0
      %838 = vmatprep.subr.mxu0 0.0
      %839 = vmatpush1.msra.mxu0 0.0
      %840 = vmatprep.subr.mxu0 0.0
      %841 = vmatpush1.msra.mxu0 0.0
      %842 = vmatprep.subr.mxu0 0.0
      %843 = vmatpush1.msra.mxu0 %v241
      %844 = vmatprep.subr.mxu0 0.0
      %845 = vmatpush1.msra.mxu0 %v240
      %846 = vmatprep.subr.mxu0 0.0
      %847 = vmatpush2.msra.mxu0 0.0
      %848 = vmatprep.subr.mxu0 0.0
      %849 = vmatpush2.msra.mxu0 0.0
      %850 = vmatprep.subr.mxu0 0.0
      %851 = vmatpush2.msra.mxu0 0.0
      %852 = vmatprep.subr.mxu0 0.0
      %853 = vmatpush2.msra.mxu0 0.0
      %854 = vmatprep.subr.mxu0 0.0
      %855 = vmatpush2.msra.mxu0 0.0
      %856 = vmatprep.subr.mxu0 0.0
      %857 = vmatpush2.msra.mxu0 0.0
      %858 = vmatprep.subr.mxu0 0.0
      %859 = vmatpush2.msra.mxu0 0.0
      %860 = vmatprep.subr.mxu0 0.0
      %861 = vmatpush2.msra.mxu0 0.0
      %862 = vmatprep.subr.mxu0 0.0
      %863 = vmatpush2.msra.mxu0 0.0
      %864 = vmatprep.subr.mxu0 0.0
      %865 = vmatpush2.msra.mxu0 0.0
      %866 = vmatprep.subr.mxu0 0.0
      %867 = vmatpush2.msra.mxu0 0.0
      %868 = vmatprep.subr.mxu0 0.0
      %869 = vmatpush2.msra.mxu0 0.0
      %870 = vmatprep.subr.mxu0 0.0
      %871 = vmatpush2.msra.mxu0 0.0
      %872 = vmatprep.subr.mxu0 0.0
      %873 = vmatpush2.msra.mxu0 0.0
      %874 = vmatprep.subr.mxu0 0.0
      %875 = vmatpush2.msra.mxu0 0.0
      %876 = vmatprep.subr.mxu0 0.0
      %877 = vmatpush2.msra.mxu0 0.0
      %878 = vmatprep.mubr.f32.mxu0 0.0
      %879 = vmatmul.mubr.f32.gmra.mxu0 %v742
      %v880 = vpop.f32.mrf.mxu0
      %v881 = vadd.f32 0.0, %v880
      %v882 = vpop.f32.mrf.mxu0
      %883 = vdwg.mxu0
      %v884 = vmul.f32 %v811, %v881
      %v885 = vmin.f32 %v571, %v641
      %v886 = vsub.f32 %v571, %v641
      %v887 = vadd.f32 %v886, 3.1415927
      %v888 = vmul.f32 %v887, 0.15915494
      %v889 = vfloor.f32 %v888
      %v890 = vmul.f32 %v889, 6.2831855
      %v891 = vsub.f32 %v887, %v890
      %v892 = vsub.f32 %v891, 3.1415927
      %v893 = vmul.f32 %v886, %v886
      %v894 = vmul.f32 %v892, %v892
      %v896 = vrot.slane %v894, 1
      %v898 = vadd.f32 %v893, %v896
      %v899 = vrsqrt.pop %v898
      %v900 = vmul.f32 %v898, %v899
      %vm901 = vcmp.eq.f32.partialorder %v898, inf
      %v902 = vsel %vm901, %v898, %v900
      %vm903 = vcmp.eq.f32.partialorder %v898, 0.0
      %v904 = vand.u32 %v898, 2147483648
      %v905 = vsel %vm903, %v904, %v902
      %v906 = vmax.f32 %v905, 1e-08
      %v907 = vlog2.pop %v906
      %v908 = vmul.f32 %v907, 0.6931472
      %v910 = vrot.slane %v905, 1
      %v912 = vmul.f32 %v885, %v910
      %v913 = vmax.f32 %v912, 1e-08
      %v914 = vlog2.pop %v913
      %v915 = vmul.f32 %v914, 0.6931472
      %v916 = vadd.f32 %v571, %v641
      %v917 = vmax.f32 %v916, 1e-08
      %v918 = vrcp.pop %v917
      %v919 = vmul.f32 %v885, %v918
      %v920 = vmax.f32 %v919, 1e-08
      %v921 = vlog2.pop %v920
      %v922 = vmul.f32 %v921, 0.6931472
      %v923 = vmul.f32 %v916, %v916
      %v925 = vrot.slane %v923, 1
      %v927 = vadd.f32 %v923, %v925
      %v928 = vrot.slane %v923, 2
      %v930 = vadd.f32 %v927, %v928
      %v932 = vrot.slane %v930, 5
      %v934 = vsub.f32 %v923, %v932
      %v935 = vmax.f32 %v934, 1e-08
      %v936 = vlog2.pop %v935
      %v937 = vmul.f32 %v936, 0.6931472
      %v939 = vrot.slane %v915, 4
      %v942 = vrot.slane %v922, 3
      %v945 = vrot.slane %v908, 3
      %vm947 = vcmask 1040384
      %v948 = vsel %vm947, %v939, %v942
      %vm949 = vcmask 1041408
      %v950 = vsel %vm949, %v948, %v945
      %vm951 = vcmask 1042432
      %v952 = vsel %vm951, %v950, %v937
      %v954 = vsel %vm353, %v395, 0
      %v957 = vsel %vm353, %v398, 0
      %v960 = vsel %vm353, %v403, 0
      %v963 = vsel %vm353, %v406, 0
      %965 = vmatprep.subr.mxu0 0.0
      %966 = vmatpush1.msra.mxu0 0.0
      %967 = vmatprep.subr.mxu0 0.0
      %968 = vmatpush1.msra.mxu0 0.0
      %969 = vmatprep.subr.mxu0 0.0
      %970 = vmatpush1.msra.mxu0 0.0
      %971 = vmatprep.subr.mxu0 0.0
      %972 = vmatpush1.msra.mxu0 0.0
      %973 = vmatprep.subr.mxu0 0.0
      %974 = vmatpush1.msra.mxu0 0.0
      %975 = vmatprep.subr.mxu0 0.0
      %976 = vmatpush1.msra.mxu0 0.0
      %977 = vmatprep.subr.mxu0 0.0
      %978 = vmatpush1.msra.mxu0 0.0
      %979 = vmatprep.subr.mxu0 0.0
      %980 = vmatpush1.msra.mxu0 0.0
      %981 = vmatprep.subr.mxu0 0.0
      %982 = vmatpush1.msra.mxu0 0.0
      %983 = vmatprep.subr.mxu0 0.0
      %984 = vmatpush1.msra.mxu0 0.0
      %985 = vmatprep.subr.mxu0 0.0
      %986 = vmatpush1.msra.mxu0 0.0
      %987 = vmatprep.subr.mxu0 0.0
      %988 = vmatpush1.msra.mxu0 0.0
      %989 = vmatprep.subr.mxu0 0.0
      %990 = vmatpush1.msra.mxu0 0.0
      %991 = vmatprep.subr.mxu0 0.0
      %992 = vmatpush1.msra.mxu0 0.0
      %993 = vmatprep.subr.mxu0 0.0
      %994 = vmatpush1.msra.mxu0 %v233
      %995 = vmatprep.subr.mxu0 0.0
      %996 = vmatpush1.msra.mxu0 %v232
      %997 = vmatprep.subr.mxu0 0.0
      %998 = vmatpush2.msra.mxu0 0.0
      %999 = vmatprep.subr.mxu0 0.0
      %1000 = vmatpush2.msra.mxu0 0.0
      %1001 = vmatprep.subr.mxu0 0.0
      %1002 = vmatpush2.msra.mxu0 0.0
      %1003 = vmatprep.subr.mxu0 0.0
      %1004 = vmatpush2.msra.mxu0 0.0
      %1005 = vmatprep.subr.mxu0 0.0
      %1006 = vmatpush2.msra.mxu0 0.0
      %1007 = vmatprep.subr.mxu0 0.0
      %1008 = vmatpush2.msra.mxu0 0.0
      %1009 = vmatprep.subr.mxu0 0.0
      %1010 = vmatpush2.msra.mxu0 0.0
      %1011 = vmatprep.subr.mxu0 0.0
      %1012 = vmatpush2.msra.mxu0 0.0
      %1013 = vmatprep.subr.mxu0 0.0
      %1014 = vmatpush2.msra.mxu0 0.0
      %1015 = vmatprep.subr.mxu0 0.0
      %1016 = vmatpush2.msra.mxu0 0.0
      %1017 = vmatprep.subr.mxu0 0.0
      %1018 = vmatpush2.msra.mxu0 0.0
      %1019 = vmatprep.subr.mxu0 0.0
      %1020 = vmatpush2.msra.mxu0 0.0
      %1021 = vmatprep.subr.mxu0 0.0
      %1022 = vmatpush2.msra.mxu0 0.0
      %1023 = vmatprep.subr.mxu0 0.0
      %1024 = vmatpush2.msra.mxu0 0.0
      %1025 = vmatprep.subr.mxu0 0.0
      %1026 = vmatpush2.msra.mxu0 0.0
      %1027 = vmatprep.subr.mxu0 0.0
      %1028 = vmatpush2.msra.mxu0 0.0
      %1029 = vmatprep.mubr.f32.mxu0 0.0
      %1030 = vmatmul.mubr.f32.gmra.mxu0 %v954
      %v1031 = vpop.f32.mrf.mxu0
      %v1032 = vadd.f32 %v723, %v1031
      %v1033 = vpop.f32.mrf.mxu0
      %1034 = vmatprep.mubr.f32.mxu0 0.0
      %1035 = vmatmul.mubr.f32.gmra.mxu0 %v957
      %v1036 = vpop.f32.mrf.mxu0
      %v1037 = vadd.f32 %v728, %v1036
      %v1038 = vpop.f32.mrf.mxu0
      %1039 = vmatprep.mubr.f32.mxu0 0.0
      %1040 = vmatmul.mubr.f32.gmra.mxu0 %v960
      %v1041 = vpop.f32.mrf.mxu0
      %v1042 = vadd.f32 %v733, %v1041
      %v1043 = vpop.f32.mrf.mxu0
      %1044 = vmatprep.mubr.f32.mxu0 0.0
      %1045 = vmatmul.mubr.f32.gmra.mxu0 %v963
      %v1046 = vpop.f32.mrf.mxu0
      %v1047 = vadd.f32 %v738, %v1046
      %v1048 = vpop.f32.mrf.mxu0
      %1049 = vdwg.mxu0
      %v1050 = vld [vmem:[%s3 + $0x28] sm:$0xf]
      %v1051 = vld [vmem:[%s3 + $0x2c] sm:$0xf]
      %v1052 = vld [vmem:[%s3 + $0x30] sm:$0xf]
      %v1053 = vld [vmem:[%s3 + $0x34] sm:$0xf]
      %v1054 = vld [vmem:[%s2] sm:$0xf]
      %1056 = vset.pattern.permute.xlu0 6
      %1057 = vperm.xlu0 %1056, %v1054
      %v1058 = vpop.permute.xlu0 %1057
      %v1060 = vmul.f32 %v952, %v1058
      %1061 = vset.pattern.permute.xlu0 7
      %1062 = vperm.xlu0 %1061, %v1054
      %v1063 = vpop.permute.xlu0 %1062
      %v1065 = vadd.f32 %v1060, %v1063
      %v1066 = vmax.f32 %v1065, 0.0
      %v1067 = vpack.c.bf16 %v1066, %v1066
      %v1072 = vunpack.c.l.b16 %v1050
      %v1073 = vunpack.c.l.b16 %v1051
      %v1074 = vunpack.c.l.b16 %v1052
      %v1075 = vunpack.c.l.b16 %v1053
      %v1076 = vpack.c.b16 %v1073, %v1072
      %v1077 = vpack.c.b16 %v1075, %v1074
      %vm1078 = vcmask 31744
      %v1080 = vsel %vm1078, %v1076, 0
      %v1083 = vsel %vm1078, %v1077, 0
      %v1086 = vsel %vm949, %v1067, 0
      %1088 = vmatprep.subr.bf16.mxu0 0
      %1089 = vmatpush1.bf16.msra.mxu0 0
      %1090 = vmatprep.subr.bf16.mxu0 0
      %1091 = vmatpush1.bf16.msra.mxu0 0
      %1092 = vmatprep.subr.bf16.mxu0 0
      %1093 = vmatpush1.bf16.msra.mxu0 0
      %1094 = vmatprep.subr.bf16.mxu0 0
      %1095 = vmatpush1.bf16.msra.mxu0 0
      %1096 = vmatprep.subr.bf16.mxu0 0
      %1097 = vmatpush1.bf16.msra.mxu0 0
      %1098 = vmatprep.subr.bf16.mxu0 0
      %1099 = vmatpush1.bf16.msra.mxu0 0
      %1100 = vmatprep.subr.bf16.mxu0 0
      %1101 = vmatpush1.bf16.msra.mxu0 0
      %1102 = vmatprep.subr.bf16.mxu0 0
      %1103 = vmatpush1.bf16.msra.mxu0 %v1086
      %1104 = vmatprep.subr.bf16.mxu0 0
      %1105 = vmatpush2.bf16.msra.mxu0 0
      %1106 = vmatprep.subr.bf16.mxu0 0
      %1107 = vmatpush2.bf16.msra.mxu0 0
      %1108 = vmatprep.subr.bf16.mxu0 0
      %1109 = vmatpush2.bf16.msra.mxu0 0
      %1110 = vmatprep.subr.bf16.mxu0 0
      %1111 = vmatpush2.bf16.msra.mxu0 0
      %1112 = vmatprep.subr.bf16.mxu0 0
      %1113 = vmatpush2.bf16.msra.mxu0 0
      %1114 = vmatprep.subr.bf16.mxu0 0
      %1115 = vmatpush2.bf16.msra.mxu0 0
      %1116 = vmatprep.subr.bf16.mxu0 0
      %1117 = vmatpush2.bf16.msra.mxu0 0
      %1118 = vmatprep.subr.bf16.mxu0 0
      %1119 = vmatpush2.bf16.msra.mxu0 0
      %1120 = vmatprep.mubr.bf16.mxu0 0
      %1121 = vmatmul.mubr.bf16.gmra.mxu0 %v1080
      %v1122 = vpop.f32.mrf.mxu0
      %v1123 = vadd.f32 0.0, %v1122
      %v1124 = vpop.f32.mrf.mxu0
      %v1125 = vpop.f32.mrf.mxu0
      %v1126 = vadd.f32 0.0, %v1125
      %v1127 = vpop.f32.mrf.mxu0
      %1128 = vmatprep.mubr.bf16.mxu0 0
      %1129 = vmatmul.mubr.bf16.gmra.mxu0 %v1083
      %v1130 = vpop.f32.mrf.mxu0
      %v1131 = vadd.f32 0.0, %v1130
      %v1132 = vpop.f32.mrf.mxu0
      %v1133 = vpop.f32.mrf.mxu0
      %v1134 = vadd.f32 0.0, %v1133
      %v1135 = vpop.f32.mrf.mxu0
      %1136 = vdwg.mxu0
      %v1137 = vadd.f32 %v1032, %v1123
      %v1138 = vadd.f32 %v1037, %v1126
      %v1139 = vadd.f32 %v1042, %v1131
      %v1140 = vadd.f32 %v1047, %v1134
      %v1141 = vld [vmem:[%s3 + $0x38] sm:$0xf]
      %v1142 = vld [vmem:[%s3 + $0x3c] sm:$0xf]
      %v1143 = vld [vmem:[%s3 + $0x40] sm:$0xf]
      %v1144 = vld [vmem:[%s3 + $0x44] sm:$0xf]
      %v1145 = vld [vmem:[%s2] sm:$0xff]
      %v1146 = vld [vmem:[%s2 + $0x8] sm:$0xff]
      %v1147 = vld [vmem:[%s2 + $0x10] sm:$0xff]
      %v1148 = vld [vmem:[%s2 + $0x18] sm:$0xff]
      %1150 = vset.pattern.permute.xlu0 8
      %1151 = vperm.xlu0 %1150, %v1145
      %v1152 = vpop.permute.xlu0 %1151
      %1155 = vset.pattern.permute.xlu0 8
      %1156 = vperm.xlu0 %1155, %v1146
      %v1157 = vpop.permute.xlu0 %1156
      %1160 = vset.pattern.permute.xlu0 8
      %1161 = vperm.xlu0 %1160, %v1147
      %v1162 = vpop.permute.xlu0 %1161
      %1165 = vset.pattern.permute.xlu0 8
      %1166 = vperm.xlu0 %1165, %v1148
      %v1167 = vpop.permute.xlu0 %1166
      %v1169 = vmul.f32 %v1137, %v1152
      %v1170 = vmul.f32 %v1138, %v1157
      %v1171 = vmul.f32 %v1139, %v1162
      %v1172 = vmul.f32 %v1140, %v1167
      %1173 = vset.pattern.permute.xlu0 9
      %1174 = vperm.xlu0 %1173, %v1145
      %v1175 = vpop.permute.xlu0 %1174
      %1177 = vset.pattern.permute.xlu0 9
      %1178 = vperm.xlu0 %1177, %v1146
      %v1179 = vpop.permute.xlu0 %1178
      %1181 = vset.pattern.permute.xlu0 9
      %1182 = vperm.xlu0 %1181, %v1147
      %v1183 = vpop.permute.xlu0 %1182
      %1185 = vset.pattern.permute.xlu0 9
      %1186 = vperm.xlu0 %1185, %v1148
      %v1187 = vpop.permute.xlu0 %1186
      %v1189 = vadd.f32 %v1169, %v1175
      %v1190 = vadd.f32 %v1170, %v1179
      %v1191 = vadd.f32 %v1171, %v1183
      %v1192 = vadd.f32 %v1172, %v1187
      %v1193 = vmax.f32 %v1189, 0.0
      %v1194 = vmax.f32 %v1190, 0.0
      %v1195 = vmax.f32 %v1191, 0.0
      %v1196 = vmax.f32 %v1192, 0.0
      %v1197 = vpack.c.bf16 %v1194, %v1193
      %v1198 = vpack.c.bf16 %v1196, %v1195
      %v1203 = vunpack.c.l.b16 %v1141
      %v1204 = vunpack.c.l.b16 %v1142
      %v1205 = vunpack.c.l.b16 %v1143
      %v1206 = vunpack.c.l.b16 %v1144
      %v1207 = vpack.c.b16 %v1204, %v1203
      %v1208 = vpack.c.b16 %v1206, %v1205
      %vm1209 = vcmask 261120
      %v1211 = vsel %vm1209, %v1207, 0
      %v1214 = vsel %vm1209, %v1208, 0
      %1216 = vmatprep.subr.bf16.mxu0 0
      %1217 = vmatpush1.bf16.msra.mxu0 0
      %1218 = vmatprep.subr.bf16.mxu0 0
      %1219 = vmatpush1.bf16.msra.mxu0 0
      %1220 = vmatprep.subr.bf16.mxu0 0
      %1221 = vmatpush1.bf16.msra.mxu0 0
      %1222 = vmatprep.subr.bf16.mxu0 0
      %1223 = vmatpush1.bf16.msra.mxu0 0
      %1224 = vmatprep.subr.bf16.mxu0 0
      %1225 = vmatpush1.bf16.msra.mxu0 0
      %1226 = vmatprep.subr.bf16.mxu0 0
      %1227 = vmatpush1.bf16.msra.mxu0 0
      %1228 = vmatprep.subr.bf16.mxu0 0
      %1229 = vmatpush1.bf16.msra.mxu0 %v1198
      %1230 = vmatprep.subr.bf16.mxu0 0
      %1231 = vmatpush1.bf16.msra.mxu0 %v1197
      %1232 = vmatprep.subr.bf16.mxu0 0
      %1233 = vmatpush2.bf16.msra.mxu0 0
      %1234 = vmatprep.subr.bf16.mxu0 0
      %1235 = vmatpush2.bf16.msra.mxu0 0
      %1236 = vmatprep.subr.bf16.mxu0 0
      %1237 = vmatpush2.bf16.msra.mxu0 0
      %1238 = vmatprep.subr.bf16.mxu0 0
      %1239 = vmatpush2.bf16.msra.mxu0 0
      %1240 = vmatprep.subr.bf16.mxu0 0
      %1241 = vmatpush2.bf16.msra.mxu0 0
      %1242 = vmatprep.subr.bf16.mxu0 0
      %1243 = vmatpush2.bf16.msra.mxu0 0
      %1244 = vmatprep.subr.bf16.mxu0 0
      %1245 = vmatpush2.bf16.msra.mxu0 0
      %1246 = vmatprep.subr.bf16.mxu0 0
      %1247 = vmatpush2.bf16.msra.mxu0 0
      %1248 = vmatprep.mubr.bf16.mxu0 0
      %1249 = vmatmul.mubr.bf16.gmra.mxu0 %v1211
      %v1250 = vpop.f32.mrf.mxu0
      %v1251 = vadd.f32 0.0, %v1250
      %v1252 = vpop.f32.mrf.mxu0
      %v1253 = vpop.f32.mrf.mxu0
      %v1254 = vadd.f32 0.0, %v1253
      %v1255 = vpop.f32.mrf.mxu0
      %1256 = vmatprep.mubr.bf16.mxu0 0
      %1257 = vmatmul.mubr.bf16.gmra.mxu0 %v1214
      %v1258 = vpop.f32.mrf.mxu0
      %v1259 = vadd.f32 0.0, %v1258
      %v1260 = vpop.f32.mrf.mxu0
      %v1261 = vpop.f32.mrf.mxu0
      %v1262 = vadd.f32 0.0, %v1261
      %v1263 = vpop.f32.mrf.mxu0
      %1264 = vdwg.mxu0
      %v1265 = vsel %vm947, %v884, 0.0
      %1266 = vadd.xlane.f32.xlu0 %v1265
      %v1267 = vpop.xlane.xlu0 %1266
      %v1268 = vmax.f32 %v1267, 1.0
      %v1269 = vlaneseq
      %v1270 = vshrl.u32 %v1269, 7
      %v1271 = vsub.s32 0, %v1270
      %v1272 = vrot.slane %v884, %v1271
      %v1273 = vmul.f32 %v1251, %v1272
      %v1274 = vmul.f32 %v1254, %v1272
      %v1275 = vmul.f32 %v1259, %v1272
      %v1276 = vmul.f32 %v1262, %v1272
      %1277 = vadd.xlane.f32.xlu0 %v1273
      %v1278 = vpop.xlane.xlu0 %1277
      %1279 = vadd.xlane.f32.xlu0 %v1274
      %v1280 = vpop.xlane.xlu0 %1279
      %1281 = vadd.xlane.f32.xlu0 %v1275
      %v1282 = vpop.xlane.xlu0 %1281
      %1283 = vadd.xlane.f32.xlu0 %v1276
      %v1284 = vpop.xlane.xlu0 %1283
      %v1285 = vrcp.pop %v1268
      %v1286 = vlaneseq
      %v1287 = vshrl.u32 %v1286, 7
      %v1288 = vsub.s32 0, %v1287
      %v1289 = vrot.slane %v1285, %v1288
      %v1290 = vmul.f32 %v1278, %v1289
      %v1291 = vmul.f32 %v1280, %v1289
      %v1292 = vmul.f32 %v1282, %v1289
      %v1293 = vmul.f32 %v1284, %v1289
      %v1294 = vld [vmem:[%s3 + $0x48] sm:$0xf]
      %v1295 = vld [vmem:[%s3 + $0x4c] sm:$0xf]
      %v1296 = vpack.c.bf16 %v1291, %v1290
      %v1297 = vpack.c.bf16 %v1293, %v1292
      %v1300 = vunpack.c.l.b16 %v1294
      %v1301 = vunpack.c.l.b16 %v1295
      %v1302 = vpack.c.b16 %v1301, %v1300
      %v1304 = vsel %vm1209, %v1302, 0
      %1306 = vmatprep.subr.bf16.mxu0 0
      %1307 = vmatpush1.bf16.msra.mxu0 0
      %1308 = vmatprep.subr.bf16.mxu0 0
      %1309 = vmatpush1.bf16.msra.mxu0 0
      %1310 = vmatprep.subr.bf16.mxu0 0
      %1311 = vmatpush1.bf16.msra.mxu0 0
      %1312 = vmatprep.subr.bf16.mxu0 0
      %1313 = vmatpush1.bf16.msra.mxu0 0
      %1314 = vmatprep.subr.bf16.mxu0 0
      %1315 = vmatpush1.bf16.msra.mxu0 0
      %1316 = vmatprep.subr.bf16.mxu0 0
      %1317 = vmatpush1.bf16.msra.mxu0 0
      %1318 = vmatprep.subr.bf16.mxu0 0
      %1319 = vmatpush1.bf16.msra.mxu0 %v1297
      %1320 = vmatprep.subr.bf16.mxu0 0
      %1321 = vmatpush1.bf16.msra.mxu0 %v1296
      %1322 = vmatprep.subr.bf16.mxu0 0
      %1323 = vmatpush2.bf16.msra.mxu0 0
      %1324 = vmatprep.subr.bf16.mxu0 0
      %1325 = vmatpush2.bf16.msra.mxu0 0
      %1326 = vmatprep.subr.bf16.mxu0 0
      %1327 = vmatpush2.bf16.msra.mxu0 0
      %1328 = vmatprep.subr.bf16.mxu0 0
      %1329 = vmatpush2.bf16.msra.mxu0 0
      %1330 = vmatprep.subr.bf16.mxu0 0
      %1331 = vmatpush2.bf16.msra.mxu0 0
      %1332 = vmatprep.subr.bf16.mxu0 0
      %1333 = vmatpush2.bf16.msra.mxu0 0
      %1334 = vmatprep.subr.bf16.mxu0 0
      %1335 = vmatpush2.bf16.msra.mxu0 0
      %1336 = vmatprep.subr.bf16.mxu0 0
      %1337 = vmatpush2.bf16.msra.mxu0 0
      %1338 = vmatprep.mubr.bf16.mxu0 0
      %1339 = vmatmul.mubr.bf16.gmra.mxu0 %v1304
      %v1340 = vpop.f32.mrf.mxu0
      %v1341 = vadd.f32 0.0, %v1340
      %v1342 = vpop.f32.mrf.mxu0
      %v1343 = vpop.f32.mrf.mxu0
      %v1344 = vadd.f32 0.0, %v1343
      %v1345 = vpop.f32.mrf.mxu0
      %1346 = vdwg.mxu0
      %v1347 = vmax.f32 %v1341, 0.0
      %v1348 = vmax.f32 %v1344, 0.0
      %v1349 = vld [vmem:[%s3 + $0x50] sm:$0xf]
      %v1350 = vld [vmem:[%s3 + $0x54] sm:$0xf]
      %v1351 = vld [vmem:[%s3 + $0x58] sm:$0xf]
      %v1352 = vld [vmem:[%s3 + $0x5c] sm:$0xf]
      %v1353 = vpack.c.bf16 %v1348, %v1347
      %v1358 = vunpack.c.l.b16 %v1349
      %v1359 = vunpack.c.l.b16 %v1350
      %v1360 = vunpack.c.l.b16 %v1351
      %v1361 = vunpack.c.l.b16 %v1352
      %v1362 = vpack.c.b16 %v1359, %v1358
      %v1363 = vpack.c.b16 %v1361, %v1360
      %v1365 = vsel %vm353, %v1362, 0
      %v1368 = vsel %vm353, %v1363, 0
      %1370 = vmatprep.subr.bf16.mxu0 0
      %1371 = vmatpush1.bf16.msra.mxu0 0
      %1372 = vmatprep.subr.bf16.mxu0 0
      %1373 = vmatpush1.bf16.msra.mxu0 0
      %1374 = vmatprep.subr.bf16.mxu0 0
      %1375 = vmatpush1.bf16.msra.mxu0 0
      %1376 = vmatprep.subr.bf16.mxu0 0
      %1377 = vmatpush1.bf16.msra.mxu0 0
      %1378 = vmatprep.subr.bf16.mxu0 0
      %1379 = vmatpush1.bf16.msra.mxu0 0
      %1380 = vmatprep.subr.bf16.mxu0 0
      %1381 = vmatpush1.bf16.msra.mxu0 0
      %1382 = vmatprep.subr.bf16.mxu0 0
      %1383 = vmatpush1.bf16.msra.mxu0 0
      %1384 = vmatprep.subr.bf16.mxu0 0
      %1385 = vmatpush1.bf16.msra.mxu0 %v1353
      %1386 = vmatprep.subr.bf16.mxu0 0
      %1387 = vmatpush2.bf16.msra.mxu0 0
      %1388 = vmatprep.subr.bf16.mxu0 0
      %1389 = vmatpush2.bf16.msra.mxu0 0
      %1390 = vmatprep.subr.bf16.mxu0 0
      %1391 = vmatpush2.bf16.msra.mxu0 0
      %1392 = vmatprep.subr.bf16.mxu0 0
      %1393 = vmatpush2.bf16.msra.mxu0 0
      %1394 = vmatprep.subr.bf16.mxu0 0
      %1395 = vmatpush2.bf16.msra.mxu0 0
      %1396 = vmatprep.subr.bf16.mxu0 0
      %1397 = vmatpush2.bf16.msra.mxu0 0
      %1398 = vmatprep.subr.bf16.mxu0 0
      %1399 = vmatpush2.bf16.msra.mxu0 0
      %1400 = vmatprep.subr.bf16.mxu0 0
      %1401 = vmatpush2.bf16.msra.mxu0 0
      %1402 = vmatprep.mubr.bf16.mxu0 0
      %1403 = vmatmul.mubr.bf16.gmra.mxu0 %v1365
      %v1404 = vpop.f32.mrf.mxu0
      %v1405 = vadd.f32 0.0, %v1404
      %v1406 = vpop.f32.mrf.mxu0
      %v1407 = vpop.f32.mrf.mxu0
      %v1408 = vadd.f32 0.0, %v1407
      %v1409 = vpop.f32.mrf.mxu0
      %1410 = vmatprep.mubr.bf16.mxu0 0
      %1411 = vmatmul.mubr.bf16.gmra.mxu0 %v1368
      %v1412 = vpop.f32.mrf.mxu0
      %v1413 = vadd.f32 0.0, %v1412
      %v1414 = vpop.f32.mrf.mxu0
      %v1415 = vpop.f32.mrf.mxu0
      %v1416 = vadd.f32 0.0, %v1415
      %v1417 = vpop.f32.mrf.mxu0
      %1418 = vdwg.mxu0
      %v1419 = vxor.u32 %v1405, 2147483648
      %v1420 = vxor.u32 %v1408, 2147483648
      %v1421 = vxor.u32 %v1413, 2147483648
      %v1422 = vxor.u32 %v1416, 2147483648
      %v1423 = vmul.f32 %v1419, 1.442695
      %v1424 = vpow.pop %v1423
      %v1425 = vmul.f32 %v1420, 1.442695
      %v1426 = vpow.pop %v1425
      %v1427 = vmul.f32 %v1421, 1.442695
      %v1428 = vpow.pop %v1427
      %v1429 = vmul.f32 %v1422, 1.442695
      %v1430 = vpow.pop %v1429
      %v1431 = vadd.f32 %v1424, 1.0
      %v1432 = vadd.f32 %v1426, 1.0
      %v1433 = vadd.f32 %v1428, 1.0
      %v1434 = vadd.f32 %v1430, 1.0
      %v1435 = vrcp.pop %v1431
      %v1436 = vmul.f32 1.0, %v1435
      %v1437 = vrcp.pop %v1432
      %v1438 = vmul.f32 1.0, %v1437
      %v1439 = vrcp.pop %v1433
      %v1440 = vmul.f32 1.0, %v1439
      %v1441 = vrcp.pop %v1434
      %v1442 = vmul.f32 1.0, %v1441
      %1444 = vset.pattern.permute.xlu0 0
      %1445 = vperm.xlu0 %1444, %v1436
      %v1446 = vpop.permute.xlu0 %1445
      %1449 = vset.pattern.permute.xlu0 0
      %1450 = vperm.xlu0 %1449, %v1438
      %v1451 = vpop.permute.xlu0 %1450
      %1454 = vset.pattern.permute.xlu0 0
      %1455 = vperm.xlu0 %1454, %v1440
      %v1456 = vpop.permute.xlu0 %1455
      %1459 = vset.pattern.permute.xlu0 0
      %1460 = vperm.xlu0 %1459, %v1442
      %v1461 = vpop.permute.xlu0 %1460
      %v1463 = vmul.f32 %v1251, %v1446
      %v1464 = vmul.f32 %v1254, %v1451
      %v1465 = vmul.f32 %v1259, %v1456
      %v1466 = vmul.f32 %v1262, %v1461
      %1467 = vset.pattern.permute.xlu0 10
      %1468 = vperm.xlu0 %1467, %v1145
      %v1469 = vpop.permute.xlu0 %1468
      %1471 = vset.pattern.permute.xlu0 10
      %1472 = vperm.xlu0 %1471, %v1146
      %v1473 = vpop.permute.xlu0 %1472
      %1475 = vset.pattern.permute.xlu0 10
      %1476 = vperm.xlu0 %1475, %v1147
      %v1477 = vpop.permute.xlu0 %1476
      %1479 = vset.pattern.permute.xlu0 10
      %1480 = vperm.xlu0 %1479, %v1148
      %v1481 = vpop.permute.xlu0 %1480
      %v1483 = vmul.f32 %v1463, %v1469
      %v1484 = vmul.f32 %v1464, %v1473
      %v1485 = vmul.f32 %v1465, %v1477
      %v1486 = vmul.f32 %v1466, %v1481
      %1487 = vset.pattern.permute.xlu0 11
      %1488 = vperm.xlu0 %1487, %v1145
      %v1489 = vpop.permute.xlu0 %1488
      %1491 = vset.pattern.permute.xlu0 11
      %1492 = vperm.xlu0 %1491, %v1146
      %v1493 = vpop.permute.xlu0 %1492
      %1495 = vset.pattern.permute.xlu0 11
      %1496 = vperm.xlu0 %1495, %v1147
      %v1497 = vpop.permute.xlu0 %1496
      %1499 = vset.pattern.permute.xlu0 11
      %1500 = vperm.xlu0 %1499, %v1148
      %v1501 = vpop.permute.xlu0 %1500
      %v1503 = vadd.f32 %v1483, %v1489
      %v1504 = vadd.f32 %v1484, %v1493
      %v1505 = vadd.f32 %v1485, %v1497
      %v1506 = vadd.f32 %v1486, %v1501
      %v1507 = vmax.f32 %v1503, 0.0
      %v1508 = vmax.f32 %v1504, 0.0
      %v1509 = vmax.f32 %v1505, 0.0
      %v1510 = vmax.f32 %v1506, 0.0
      %v1511 = vld [vmem:[%s3 + $0x60] sm:$0xf]
      %v1512 = vld [vmem:[%s3 + $0x64] sm:$0xf]
      %v1513 = vld [vmem:[%s3 + $0x68] sm:$0xf]
      %v1514 = vld [vmem:[%s3 + $0x6c] sm:$0xf]
      %v1515 = vpack.c.bf16 %v1508, %v1507
      %v1516 = vpack.c.bf16 %v1510, %v1509
      %v1521 = vunpack.c.l.b16 %v1511
      %v1522 = vunpack.c.l.b16 %v1512
      %v1523 = vunpack.c.l.b16 %v1513
      %v1524 = vunpack.c.l.b16 %v1514
      %v1525 = vpack.c.b16 %v1522, %v1521
      %v1526 = vpack.c.b16 %v1524, %v1523
      %v1528 = vsel %vm1209, %v1525, 0
      %v1531 = vsel %vm1209, %v1526, 0
      %1533 = vmatprep.subr.bf16.mxu0 0
      %1534 = vmatpush1.bf16.msra.mxu0 0
      %1535 = vmatprep.subr.bf16.mxu0 0
      %1536 = vmatpush1.bf16.msra.mxu0 0
      %1537 = vmatprep.subr.bf16.mxu0 0
      %1538 = vmatpush1.bf16.msra.mxu0 0
      %1539 = vmatprep.subr.bf16.mxu0 0
      %1540 = vmatpush1.bf16.msra.mxu0 0
      %1541 = vmatprep.subr.bf16.mxu0 0
      %1542 = vmatpush1.bf16.msra.mxu0 0
      %1543 = vmatprep.subr.bf16.mxu0 0
      %1544 = vmatpush1.bf16.msra.mxu0 0
      %1545 = vmatprep.subr.bf16.mxu0 0
      %1546 = vmatpush1.bf16.msra.mxu0 %v1516
      %1547 = vmatprep.subr.bf16.mxu0 0
      %1548 = vmatpush1.bf16.msra.mxu0 %v1515
      %1549 = vmatprep.subr.bf16.mxu0 0
      %1550 = vmatpush2.bf16.msra.mxu0 0
      %1551 = vmatprep.subr.bf16.mxu0 0
      %1552 = vmatpush2.bf16.msra.mxu0 0
      %1553 = vmatprep.subr.bf16.mxu0 0
      %1554 = vmatpush2.bf16.msra.mxu0 0
      %1555 = vmatprep.subr.bf16.mxu0 0
      %1556 = vmatpush2.bf16.msra.mxu0 0
      %1557 = vmatprep.subr.bf16.mxu0 0
      %1558 = vmatpush2.bf16.msra.mxu0 0
      %1559 = vmatprep.subr.bf16.mxu0 0
      %1560 = vmatpush2.bf16.msra.mxu0 0
      %1561 = vmatprep.subr.bf16.mxu0 0
      %1562 = vmatpush2.bf16.msra.mxu0 0
      %1563 = vmatprep.subr.bf16.mxu0 0
      %1564 = vmatpush2.bf16.msra.mxu0 0
      %1565 = vmatprep.mubr.bf16.mxu0 0
      %1566 = vmatmul.mubr.bf16.gmra.mxu0 %v1528
      %v1567 = vpop.f32.mrf.mxu0
      %v1568 = vadd.f32 0.0, %v1567
      %v1569 = vpop.f32.mrf.mxu0
      %v1570 = vpop.f32.mrf.mxu0
      %v1571 = vadd.f32 0.0, %v1570
      %v1572 = vpop.f32.mrf.mxu0
      %1573 = vmatprep.mubr.bf16.mxu0 0
      %1574 = vmatmul.mubr.bf16.gmra.mxu0 %v1531
      %v1575 = vpop.f32.mrf.mxu0
      %v1576 = vadd.f32 0.0, %v1575
      %v1577 = vpop.f32.mrf.mxu0
      %v1578 = vpop.f32.mrf.mxu0
      %v1579 = vadd.f32 0.0, %v1578
      %v1580 = vpop.f32.mrf.mxu0
      %1581 = vdwg.mxu0
      %vm1582 = vcmp.gt.f32.partialorder %v884, 0.0
      %v1583 = vsel %vm1582, 1, 0
      %v1584 = vlaneseq
      %v1585 = vshrl.u32 %v1584, 7
      %v1586 = vsub.s32 0, %v1585
      %v1587 = vrot.slane %v1583, %v1586
      %vm1588 = vcmp.eq.s32.totalorder %v1587, 1
      %v1589 = vsel %vm1588, %v1568, -1e+09
      %v1590 = vsel %vm1588, %v1571, -1e+09
      %v1591 = vsel %vm1588, %v1576, -1e+09
      %v1592 = vsel %vm1588, %v1579, -1e+09
      %1593 = vmax.xlane.f32.xlu0 %v1589
      %v1594 = vpop.xlane.xlu0 %1593
      %1595 = vmax.xlane.f32.xlu0 %v1590
      %v1596 = vpop.xlane.xlu0 %1595
      %1597 = vmax.xlane.f32.xlu0 %v1591
      %v1598 = vpop.xlane.xlu0 %1597
      %1599 = vmax.xlane.f32.xlu0 %v1592
      %v1600 = vpop.xlane.xlu0 %1599
      %v1601 = vsub.f32 %v1589, %v1594
      %v1602 = vsub.f32 %v1590, %v1596
      %v1603 = vsub.f32 %v1591, %v1598
      %v1604 = vsub.f32 %v1592, %v1600
      %v1605 = vmul.f32 %v1601, 1.442695
      %v1606 = vpow.pop %v1605
      %v1607 = vmul.f32 %v1602, 1.442695
      %v1608 = vpow.pop %v1607
      %v1609 = vmul.f32 %v1603, 1.442695
      %v1610 = vpow.pop %v1609
      %v1611 = vmul.f32 %v1604, 1.442695
      %v1612 = vpow.pop %v1611
      %v1613 = vmul.f32 %v1606, %v1463
      %v1614 = vmul.f32 %v1608, %v1464
      %v1615 = vmul.f32 %v1610, %v1465
      %v1616 = vmul.f32 %v1612, %v1466
      %1617 = vmatprep.subr.mxu0 0.0
      %1618 = vmatpush1.xpose.msra.mxu0 0.0
      %1619 = vmatprep.subr.mxu0 0.0
      %1620 = vmatpush1.xpose.msra.mxu0 0.0
      %1621 = vmatprep.subr.mxu0 0.0
      %1622 = vmatpush1.xpose.msra.mxu0 0.0
      %1623 = vmatprep.subr.mxu0 0.0
      %1624 = vmatpush1.xpose.msra.mxu0 0.0
      %1625 = vmatprep.subr.mxu0 0.0
      %1626 = vmatpush1.xpose.msra.mxu0 0.0
      %1627 = vmatprep.subr.mxu0 0.0
      %1628 = vmatpush1.xpose.msra.mxu0 0.0
      %1629 = vmatprep.subr.mxu0 0.0
      %1630 = vmatpush1.xpose.msra.mxu0 0.0
      %1631 = vmatprep.subr.mxu0 0.0
      %1632 = vmatpush1.xpose.msra.mxu0 0.0
      %1633 = vmatprep.subr.mxu0 0.0
      %1634 = vmatpush1.xpose.msra.mxu0 0.0
      %1635 = vmatprep.subr.mxu0 0.0
      %1636 = vmatpush1.xpose.msra.mxu0 0.0
      %1637 = vmatprep.subr.mxu0 0.0
      %1638 = vmatpush1.xpose.msra.mxu0 0.0
      %1639 = vmatprep.subr.mxu0 0.0
      %1640 = vmatpush1.xpose.msra.mxu0 0.0
      %1641 = vmatprep.subr.mxu0 0.0
      %1642 = vmatpush1.xpose.msra.mxu0 0.0
      %1643 = vmatprep.subr.mxu0 0.0
      %1644 = vmatpush1.xpose.msra.mxu0 0.0
      %1645 = vmatprep.subr.mxu0 0.0
      %1646 = vmatpush1.xpose.msra.mxu0 %v233
      %1647 = vmatprep.subr.mxu0 0.0
      %1648 = vmatpush1.xpose.msra.mxu0 %v232
      %1649 = vmatprep.subr.mxu0 0.0
      %1650 = vmatpush2.xpose.msra.mxu0 0.0
      %1651 = vmatprep.subr.mxu0 0.0
      %1652 = vmatpush2.xpose.msra.mxu0 0.0
      %1653 = vmatprep.subr.mxu0 0.0
      %1654 = vmatpush2.xpose.msra.mxu0 0.0
      %1655 = vmatprep.subr.mxu0 0.0
      %1656 = vmatpush2.xpose.msra.mxu0 0.0
      %1657 = vmatprep.subr.mxu0 0.0
      %1658 = vmatpush2.xpose.msra.mxu0 0.0
      %1659 = vmatprep.subr.mxu0 0.0
      %1660 = vmatpush2.xpose.msra.mxu0 0.0
      %1661 = vmatprep.subr.mxu0 0.0
      %1662 = vmatpush2.xpose.msra.mxu0 0.0
      %1663 = vmatprep.subr.mxu0 0.0
      %1664 = vmatpush2.xpose.msra.mxu0 0.0
      %1665 = vmatprep.subr.mxu0 0.0
      %1666 = vmatpush2.xpose.msra.mxu0 0.0
      %1667 = vmatprep.subr.mxu0 0.0
      %1668 = vmatpush2.xpose.msra.mxu0 0.0
      %1669 = vmatprep.subr.mxu0 0.0
      %1670 = vmatpush2.xpose.msra.mxu0 0.0
      %1671 = vmatprep.subr.mxu0 0.0
      %1672 = vmatpush2.xpose.msra.mxu0 0.0
      %1673 = vmatprep.subr.mxu0 0.0
      %1674 = vmatpush2.xpose.msra.mxu0 0.0
      %1675 = vmatprep.subr.mxu0 0.0
      %1676 = vmatpush2.xpose.msra.mxu0 0.0
      %1677 = vmatprep.subr.mxu0 0.0
      %1678 = vmatpush2.xpose.msra.mxu0 0.0
      %1679 = vmatprep.subr.mxu0 0.0
      %1680 = vmatpush2.xpose.msra.mxu0 0.0
      %1681 = vmatprep.mubr.f32.mxu0 0.0
      %1682 = vmatmul.mubr.f32.gmra.mxu0 %v1613
      %v1683 = vpop.f32.mrf.mxu0
      %v1684 = vadd.f32 0.0, %v1683
      %v1685 = vpop.f32.mrf.mxu0
      %1686 = vmatprep.mubr.f32.mxu0 0.0
      %1687 = vmatmul.mubr.f32.gmra.mxu0 %v1614
      %v1688 = vpop.f32.mrf.mxu0
      %v1689 = vadd.f32 0.0, %v1688
      %v1690 = vpop.f32.mrf.mxu0
      %1691 = vmatprep.mubr.f32.mxu0 0.0
      %1692 = vmatmul.mubr.f32.gmra.mxu0 %v1615
      %v1693 = vpop.f32.mrf.mxu0
      %v1694 = vadd.f32 0.0, %v1693
      %v1695 = vpop.f32.mrf.mxu0
      %1696 = vmatprep.mubr.f32.mxu0 0.0
      %1697 = vmatmul.mubr.f32.gmra.mxu0 %v1616
      %v1698 = vpop.f32.mrf.mxu0
      %v1699 = vadd.f32 0.0, %v1698
      %v1700 = vpop.f32.mrf.mxu0
      %1701 = vdwg.mxu0
      %1702 = vmatprep.subr.mxu0 0.0
      %1703 = vmatpush1.xpose.msra.mxu0 0.0
      %1704 = vmatprep.subr.mxu0 0.0
      %1705 = vmatpush1.xpose.msra.mxu0 0.0
      %1706 = vmatprep.subr.mxu0 0.0
      %1707 = vmatpush1.xpose.msra.mxu0 0.0
      %1708 = vmatprep.subr.mxu0 0.0
      %1709 = vmatpush1.xpose.msra.mxu0 0.0
      %1710 = vmatprep.subr.mxu0 0.0
      %1711 = vmatpush1.xpose.msra.mxu0 0.0
      %1712 = vmatprep.subr.mxu0 0.0
      %1713 = vmatpush1.xpose.msra.mxu0 0.0
      %1714 = vmatprep.subr.mxu0 0.0
      %1715 = vmatpush1.xpose.msra.mxu0 0.0
      %1716 = vmatprep.subr.mxu0 0.0
      %1717 = vmatpush1.xpose.msra.mxu0 0.0
      %1718 = vmatprep.subr.mxu0 0.0
      %1719 = vmatpush1.xpose.msra.mxu0 0.0
      %1720 = vmatprep.subr.mxu0 0.0
      %1721 = vmatpush1.xpose.msra.mxu0 0.0
      %1722 = vmatprep.subr.mxu0 0.0
      %1723 = vmatpush1.xpose.msra.mxu0 0.0
      %1724 = vmatprep.subr.mxu0 0.0
      %1725 = vmatpush1.xpose.msra.mxu0 0.0
      %1726 = vmatprep.subr.mxu0 0.0
      %1727 = vmatpush1.xpose.msra.mxu0 0.0
      %1728 = vmatprep.subr.mxu0 0.0
      %1729 = vmatpush1.xpose.msra.mxu0 0.0
      %1730 = vmatprep.subr.mxu0 0.0
      %1731 = vmatpush1.xpose.msra.mxu0 %v233
      %1732 = vmatprep.subr.mxu0 0.0
      %1733 = vmatpush1.xpose.msra.mxu0 %v232
      %1734 = vmatprep.subr.mxu0 0.0
      %1735 = vmatpush2.xpose.msra.mxu0 0.0
      %1736 = vmatprep.subr.mxu0 0.0
      %1737 = vmatpush2.xpose.msra.mxu0 0.0
      %1738 = vmatprep.subr.mxu0 0.0
      %1739 = vmatpush2.xpose.msra.mxu0 0.0
      %1740 = vmatprep.subr.mxu0 0.0
      %1741 = vmatpush2.xpose.msra.mxu0 0.0
      %1742 = vmatprep.subr.mxu0 0.0
      %1743 = vmatpush2.xpose.msra.mxu0 0.0
      %1744 = vmatprep.subr.mxu0 0.0
      %1745 = vmatpush2.xpose.msra.mxu0 0.0
      %1746 = vmatprep.subr.mxu0 0.0
      %1747 = vmatpush2.xpose.msra.mxu0 0.0
      %1748 = vmatprep.subr.mxu0 0.0
      %1749 = vmatpush2.xpose.msra.mxu0 0.0
      %1750 = vmatprep.subr.mxu0 0.0
      %1751 = vmatpush2.xpose.msra.mxu0 0.0
      %1752 = vmatprep.subr.mxu0 0.0
      %1753 = vmatpush2.xpose.msra.mxu0 0.0
      %1754 = vmatprep.subr.mxu0 0.0
      %1755 = vmatpush2.xpose.msra.mxu0 0.0
      %1756 = vmatprep.subr.mxu0 0.0
      %1757 = vmatpush2.xpose.msra.mxu0 0.0
      %1758 = vmatprep.subr.mxu0 0.0
      %1759 = vmatpush2.xpose.msra.mxu0 0.0
      %1760 = vmatprep.subr.mxu0 0.0
      %1761 = vmatpush2.xpose.msra.mxu0 0.0
      %1762 = vmatprep.subr.mxu0 0.0
      %1763 = vmatpush2.xpose.msra.mxu0 0.0
      %1764 = vmatprep.subr.mxu0 0.0
      %1765 = vmatpush2.xpose.msra.mxu0 0.0
      %1766 = vmatprep.mubr.f32.mxu0 0.0
      %1767 = vmatmul.mubr.f32.gmra.mxu0 %v1606
      %v1768 = vpop.f32.mrf.mxu0
      %v1769 = vadd.f32 0.0, %v1768
      %v1770 = vpop.f32.mrf.mxu0
      %1771 = vmatprep.mubr.f32.mxu0 0.0
      %1772 = vmatmul.mubr.f32.gmra.mxu0 %v1608
      %v1773 = vpop.f32.mrf.mxu0
      %v1774 = vadd.f32 0.0, %v1773
      %v1775 = vpop.f32.mrf.mxu0
      %1776 = vmatprep.mubr.f32.mxu0 0.0
      %1777 = vmatmul.mubr.f32.gmra.mxu0 %v1610
      %v1778 = vpop.f32.mrf.mxu0
      %v1779 = vadd.f32 0.0, %v1778
      %v1780 = vpop.f32.mrf.mxu0
      %1781 = vmatprep.mubr.f32.mxu0 0.0
      %1782 = vmatmul.mubr.f32.gmra.mxu0 %v1612
      %v1783 = vpop.f32.mrf.mxu0
      %v1784 = vadd.f32 0.0, %v1783
      %v1785 = vpop.f32.mrf.mxu0
      %1786 = vdwg.mxu0
      %1787 = vmatprep.subr.mxu0 0.0
      %1788 = vmatpush1.xpose.msra.mxu0 0.0
      %1789 = vmatprep.subr.mxu0 0.0
      %1790 = vmatpush1.xpose.msra.mxu0 0.0
      %1791 = vmatprep.subr.mxu0 0.0
      %1792 = vmatpush1.xpose.msra.mxu0 0.0
      %1793 = vmatprep.subr.mxu0 0.0
      %1794 = vmatpush1.xpose.msra.mxu0 0.0
      %1795 = vmatprep.subr.mxu0 0.0
      %1796 = vmatpush1.xpose.msra.mxu0 0.0
      %1797 = vmatprep.subr.mxu0 0.0
      %1798 = vmatpush1.xpose.msra.mxu0 0.0
      %1799 = vmatprep.subr.mxu0 0.0
      %1800 = vmatpush1.xpose.msra.mxu0 0.0
      %1801 = vmatprep.subr.mxu0 0.0
      %1802 = vmatpush1.xpose.msra.mxu0 0.0
      %1803 = vmatprep.subr.mxu0 0.0
      %1804 = vmatpush1.xpose.msra.mxu0 0.0
      %1805 = vmatprep.subr.mxu0 0.0
      %1806 = vmatpush1.xpose.msra.mxu0 0.0
      %1807 = vmatprep.subr.mxu0 0.0
      %1808 = vmatpush1.xpose.msra.mxu0 0.0
      %1809 = vmatprep.subr.mxu0 0.0
      %1810 = vmatpush1.xpose.msra.mxu0 0.0
      %1811 = vmatprep.subr.mxu0 0.0
      %1812 = vmatpush1.xpose.msra.mxu0 0.0
      %1813 = vmatprep.subr.mxu0 0.0
      %1814 = vmatpush1.xpose.msra.mxu0 0.0
      %1815 = vmatprep.subr.mxu0 0.0
      %1816 = vmatpush1.xpose.msra.mxu0 %v233
      %1817 = vmatprep.subr.mxu0 0.0
      %1818 = vmatpush1.xpose.msra.mxu0 %v232
      %1819 = vmatprep.subr.mxu0 0.0
      %1820 = vmatpush2.xpose.msra.mxu0 0.0
      %1821 = vmatprep.subr.mxu0 0.0
      %1822 = vmatpush2.xpose.msra.mxu0 0.0
      %1823 = vmatprep.subr.mxu0 0.0
      %1824 = vmatpush2.xpose.msra.mxu0 0.0
      %1825 = vmatprep.subr.mxu0 0.0
      %1826 = vmatpush2.xpose.msra.mxu0 0.0
      %1827 = vmatprep.subr.mxu0 0.0
      %1828 = vmatpush2.xpose.msra.mxu0 0.0
      %1829 = vmatprep.subr.mxu0 0.0
      %1830 = vmatpush2.xpose.msra.mxu0 0.0
      %1831 = vmatprep.subr.mxu0 0.0
      %1832 = vmatpush2.xpose.msra.mxu0 0.0
      %1833 = vmatprep.subr.mxu0 0.0
      %1834 = vmatpush2.xpose.msra.mxu0 0.0
      %1835 = vmatprep.subr.mxu0 0.0
      %1836 = vmatpush2.xpose.msra.mxu0 0.0
      %1837 = vmatprep.subr.mxu0 0.0
      %1838 = vmatpush2.xpose.msra.mxu0 0.0
      %1839 = vmatprep.subr.mxu0 0.0
      %1840 = vmatpush2.xpose.msra.mxu0 0.0
      %1841 = vmatprep.subr.mxu0 0.0
      %1842 = vmatpush2.xpose.msra.mxu0 0.0
      %1843 = vmatprep.subr.mxu0 0.0
      %1844 = vmatpush2.xpose.msra.mxu0 0.0
      %1845 = vmatprep.subr.mxu0 0.0
      %1846 = vmatpush2.xpose.msra.mxu0 0.0
      %1847 = vmatprep.subr.mxu0 0.0
      %1848 = vmatpush2.xpose.msra.mxu0 0.0
      %1849 = vmatprep.subr.mxu0 0.0
      %1850 = vmatpush2.xpose.msra.mxu0 0.0
      %1851 = vmatprep.mubr.f32.mxu0 0.0
      %1852 = vmatmul.mubr.f32.gmra.mxu0 %v1463
      %v1853 = vpop.f32.mrf.mxu0
      %v1854 = vadd.f32 0.0, %v1853
      %v1855 = vpop.f32.mrf.mxu0
      %1856 = vmatprep.mubr.f32.mxu0 0.0
      %1857 = vmatmul.mubr.f32.gmra.mxu0 %v1464
      %v1858 = vpop.f32.mrf.mxu0
      %v1859 = vadd.f32 0.0, %v1858
      %v1860 = vpop.f32.mrf.mxu0
      %1861 = vmatprep.mubr.f32.mxu0 0.0
      %1862 = vmatmul.mubr.f32.gmra.mxu0 %v1465
      %v1863 = vpop.f32.mrf.mxu0
      %v1864 = vadd.f32 0.0, %v1863
      %v1865 = vpop.f32.mrf.mxu0
      %1866 = vmatprep.mubr.f32.mxu0 0.0
      %1867 = vmatmul.mubr.f32.gmra.mxu0 %v1466
      %v1868 = vpop.f32.mrf.mxu0
      %v1869 = vadd.f32 0.0, %v1868
      %v1870 = vpop.f32.mrf.mxu0
      %1871 = vdwg.mxu0
      %vm1872 = vcmp.le.f32.partialorder %v1769, 0.0
      %vm1873 = vcmp.le.f32.partialorder %v1774, 0.0
      %vm1874 = vcmp.le.f32.partialorder %v1779, 0.0
      %vm1875 = vcmp.le.f32.partialorder %v1784, 0.0
      %v1876 = vmax.f32 %v1769, 1e-20
      %v1877 = vmax.f32 %v1774, 1e-20
      %v1878 = vmax.f32 %v1779, 1e-20
      %v1879 = vmax.f32 %v1784, 1e-20
      %v1880 = vsel %vm1872, 8.0, %v1876
      %v1881 = vsel %vm1873, 8.0, %v1877
      %v1882 = vsel %vm1874, 8.0, %v1878
      %v1883 = vsel %vm1875, 8.0, %v1879
      %v1884 = vsel %vm1872, %v1854, %v1684
      %v1885 = vsel %vm1873, %v1859, %v1689
      %v1886 = vsel %vm1874, %v1864, %v1694
      %v1887 = vsel %vm1875, %v1869, %v1699
      %v1888 = vrcp.pop %v1880
      %v1889 = vrcp.pop %v1881
      %v1890 = vrcp.pop %v1882
      %v1891 = vrcp.pop %v1883
      %v1892 = vmul.f32 %v1884, %v1888
      %v1893 = vmul.f32 %v1885, %v1889
      %v1894 = vmul.f32 %v1886, %v1890
      %v1895 = vmul.f32 %v1887, %v1891
      %v1896 = vld [vmem:[%s3 + $0x70] sm:$0xf]
      %v1897 = vld [vmem:[%s3 + $0x74] sm:$0xf]
      %v1898 = vld [vmem:[%s3 + $0x78] sm:$0xf]
      %v1899 = vld [vmem:[%s3 + $0x7c] sm:$0xf]
      %1900 = vset.pattern.permute.xlu0 12
      %1901 = vperm.xlu0 %1900, %v1145
      %v1902 = vpop.permute.xlu0 %1901
      %1904 = vset.pattern.permute.xlu0 12
      %1905 = vperm.xlu0 %1904, %v1146
      %v1906 = vpop.permute.xlu0 %1905
      %1908 = vset.pattern.permute.xlu0 12
      %1909 = vperm.xlu0 %1908, %v1147
      %v1910 = vpop.permute.xlu0 %1909
      %1912 = vset.pattern.permute.xlu0 12
      %1913 = vperm.xlu0 %1912, %v1148
      %v1914 = vpop.permute.xlu0 %1913
      %v1916 = vmul.f32 %v1892, %v1902
      %v1917 = vmul.f32 %v1893, %v1906
      %v1918 = vmul.f32 %v1894, %v1910
      %v1919 = vmul.f32 %v1895, %v1914
      %1920 = vset.pattern.permute.xlu0 13
      %1921 = vperm.xlu0 %1920, %v1145
      %v1922 = vpop.permute.xlu0 %1921
      %1924 = vset.pattern.permute.xlu0 13
      %1925 = vperm.xlu0 %1924, %v1146
      %v1926 = vpop.permute.xlu0 %1925
      %1928 = vset.pattern.permute.xlu0 13
      %1929 = vperm.xlu0 %1928, %v1147
      %v1930 = vpop.permute.xlu0 %1929
      %1932 = vset.pattern.permute.xlu0 13
      %1933 = vperm.xlu0 %1932, %v1148
      %v1934 = vpop.permute.xlu0 %1933
      %v1936 = vadd.f32 %v1916, %v1922
      %v1937 = vadd.f32 %v1917, %v1926
      %v1938 = vadd.f32 %v1918, %v1930
      %v1939 = vadd.f32 %v1919, %v1934
      %v1940 = vmax.f32 %v1936, 0.0
      %v1941 = vmax.f32 %v1937, 0.0
      %v1942 = vmax.f32 %v1938, 0.0
      %v1943 = vmax.f32 %v1939, 0.0
      %v1944 = vpack.c.bf16 %v1941, %v1940
      %v1945 = vpack.c.bf16 %v1943, %v1942
      %v1950 = vunpack.c.l.b16 %v1896
      %v1951 = vunpack.c.l.b16 %v1897
      %v1952 = vunpack.c.l.b16 %v1898
      %v1953 = vunpack.c.l.b16 %v1899
      %v1954 = vpack.c.b16 %v1951, %v1950
      %v1955 = vpack.c.b16 %v1953, %v1952
      %v1957 = vsel %vm1209, %v1954, 0
      %v1960 = vsel %vm1209, %v1955, 0
      %1962 = vmatprep.subr.bf16.mxu0 0
      %1963 = vmatpush1.bf16.msra.mxu0 0
      %1964 = vmatprep.subr.bf16.mxu0 0
      %1965 = vmatpush1.bf16.msra.mxu0 0
      %1966 = vmatprep.subr.bf16.mxu0 0
      %1967 = vmatpush1.bf16.msra.mxu0 0
      %1968 = vmatprep.subr.bf16.mxu0 0
      %1969 = vmatpush1.bf16.msra.mxu0 0
      %1970 = vmatprep.subr.bf16.mxu0 0
      %1971 = vmatpush1.bf16.msra.mxu0 0
      %1972 = vmatprep.subr.bf16.mxu0 0
      %1973 = vmatpush1.bf16.msra.mxu0 0
      %1974 = vmatprep.subr.bf16.mxu0 0
      %1975 = vmatpush1.bf16.msra.mxu0 %v1945
      %1976 = vmatprep.subr.bf16.mxu0 0
      %1977 = vmatpush1.bf16.msra.mxu0 %v1944
      %1978 = vmatprep.subr.bf16.mxu0 0
      %1979 = vmatpush2.bf16.msra.mxu0 0
      %1980 = vmatprep.subr.bf16.mxu0 0
      %1981 = vmatpush2.bf16.msra.mxu0 0
      %1982 = vmatprep.subr.bf16.mxu0 0
      %1983 = vmatpush2.bf16.msra.mxu0 0
      %1984 = vmatprep.subr.bf16.mxu0 0
      %1985 = vmatpush2.bf16.msra.mxu0 0
      %1986 = vmatprep.subr.bf16.mxu0 0
      %1987 = vmatpush2.bf16.msra.mxu0 0
      %1988 = vmatprep.subr.bf16.mxu0 0
      %1989 = vmatpush2.bf16.msra.mxu0 0
      %1990 = vmatprep.subr.bf16.mxu0 0
      %1991 = vmatpush2.bf16.msra.mxu0 0
      %1992 = vmatprep.subr.bf16.mxu0 0
      %1993 = vmatpush2.bf16.msra.mxu0 0
      %1994 = vmatprep.mubr.bf16.mxu0 0
      %1995 = vmatmul.mubr.bf16.gmra.mxu0 %v1957
      %v1996 = vpop.f32.mrf.mxu0
      %v1997 = vadd.f32 0.0, %v1996
      %v1998 = vpop.f32.mrf.mxu0
      %v1999 = vpop.f32.mrf.mxu0
      %v2000 = vadd.f32 0.0, %v1999
      %v2001 = vpop.f32.mrf.mxu0
      %2002 = vmatprep.mubr.bf16.mxu0 0
      %2003 = vmatmul.mubr.bf16.gmra.mxu0 %v1960
      %v2004 = vpop.f32.mrf.mxu0
      %v2005 = vadd.f32 0.0, %v2004
      %v2006 = vpop.f32.mrf.mxu0
      %v2007 = vpop.f32.mrf.mxu0
      %v2008 = vadd.f32 0.0, %v2007
      %v2009 = vpop.f32.mrf.mxu0
      %2010 = vdwg.mxu0
      %v2011 = vld [vmem:[%s3 + $0x80] sm:$0xf]
      %v2012 = vld [vmem:[%s3 + $0x84] sm:$0xf]
      %v2013 = vld [vmem:[%s3 + $0x88] sm:$0xf]
      %v2014 = vld [vmem:[%s3 + $0x8c] sm:$0xf]
      %2015 = vset.pattern.permute.xlu0 14
      %2016 = vperm.xlu0 %2015, %v1145
      %v2017 = vpop.permute.xlu0 %2016
      %2019 = vset.pattern.permute.xlu0 14
      %2020 = vperm.xlu0 %2019, %v1146
      %v2021 = vpop.permute.xlu0 %2020
      %2023 = vset.pattern.permute.xlu0 14
      %2024 = vperm.xlu0 %2023, %v1147
      %v2025 = vpop.permute.xlu0 %2024
      %2027 = vset.pattern.permute.xlu0 14
      %2028 = vperm.xlu0 %2027, %v1148
      %v2029 = vpop.permute.xlu0 %2028
      %v2031 = vmul.f32 %v1997, %v2017
      %v2032 = vmul.f32 %v2000, %v2021
      %v2033 = vmul.f32 %v2005, %v2025
      %v2034 = vmul.f32 %v2008, %v2029
      %2035 = vset.pattern.permute.xlu0 15
      %2036 = vperm.xlu0 %2035, %v1145
      %v2037 = vpop.permute.xlu0 %2036
      %2039 = vset.pattern.permute.xlu0 15
      %2040 = vperm.xlu0 %2039, %v1146
      %v2041 = vpop.permute.xlu0 %2040
      %2043 = vset.pattern.permute.xlu0 15
      %2044 = vperm.xlu0 %2043, %v1147
      %v2045 = vpop.permute.xlu0 %2044
      %2047 = vset.pattern.permute.xlu0 15
      %2048 = vperm.xlu0 %2047, %v1148
      %v2049 = vpop.permute.xlu0 %2048
      %v2051 = vadd.f32 %v2031, %v2037
      %v2052 = vadd.f32 %v2032, %v2041
      %v2053 = vadd.f32 %v2033, %v2045
      %v2054 = vadd.f32 %v2034, %v2049
      %v2055 = vmax.f32 %v2051, 0.0
      %v2056 = vmax.f32 %v2052, 0.0
      %v2057 = vmax.f32 %v2053, 0.0
      %v2058 = vmax.f32 %v2054, 0.0
      %v2059 = vpack.c.bf16 %v2056, %v2055
      %v2060 = vpack.c.bf16 %v2058, %v2057
      %v2065 = vunpack.c.l.b16 %v2011
      %v2066 = vunpack.c.l.b16 %v2012
      %v2067 = vunpack.c.l.b16 %v2013
      %v2068 = vunpack.c.l.b16 %v2014
      %v2069 = vpack.c.b16 %v2066, %v2065
      %v2070 = vpack.c.b16 %v2068, %v2067
      %v2072 = vsel %vm1209, %v2069, 0
      %v2075 = vsel %vm1209, %v2070, 0
      %2077 = vmatprep.subr.bf16.mxu0 0
      %2078 = vmatpush1.bf16.msra.mxu0 0
      %2079 = vmatprep.subr.bf16.mxu0 0
      %2080 = vmatpush1.bf16.msra.mxu0 0
      %2081 = vmatprep.subr.bf16.mxu0 0
      %2082 = vmatpush1.bf16.msra.mxu0 0
      %2083 = vmatprep.subr.bf16.mxu0 0
      %2084 = vmatpush1.bf16.msra.mxu0 0
      %2085 = vmatprep.subr.bf16.mxu0 0
      %2086 = vmatpush1.bf16.msra.mxu0 0
      %2087 = vmatprep.subr.bf16.mxu0 0
      %2088 = vmatpush1.bf16.msra.mxu0 0
      %2089 = vmatprep.subr.bf16.mxu0 0
      %2090 = vmatpush1.bf16.msra.mxu0 %v2060
      %2091 = vmatprep.subr.bf16.mxu0 0
      %2092 = vmatpush1.bf16.msra.mxu0 %v2059
      %2093 = vmatprep.subr.bf16.mxu0 0
      %2094 = vmatpush2.bf16.msra.mxu0 0
      %2095 = vmatprep.subr.bf16.mxu0 0
      %2096 = vmatpush2.bf16.msra.mxu0 0
      %2097 = vmatprep.subr.bf16.mxu0 0
      %2098 = vmatpush2.bf16.msra.mxu0 0
      %2099 = vmatprep.subr.bf16.mxu0 0
      %2100 = vmatpush2.bf16.msra.mxu0 0
      %2101 = vmatprep.subr.bf16.mxu0 0
      %2102 = vmatpush2.bf16.msra.mxu0 0
      %2103 = vmatprep.subr.bf16.mxu0 0
      %2104 = vmatpush2.bf16.msra.mxu0 0
      %2105 = vmatprep.subr.bf16.mxu0 0
      %2106 = vmatpush2.bf16.msra.mxu0 0
      %2107 = vmatprep.subr.bf16.mxu0 0
      %2108 = vmatpush2.bf16.msra.mxu0 0
      %2109 = vmatprep.mubr.bf16.mxu0 0
      %2110 = vmatmul.mubr.bf16.gmra.mxu0 %v2072
      %v2111 = vpop.f32.mrf.mxu0
      %v2112 = vadd.f32 0.0, %v2111
      %v2113 = vpop.f32.mrf.mxu0
      %v2114 = vpop.f32.mrf.mxu0
      %v2115 = vadd.f32 0.0, %v2114
      %v2116 = vpop.f32.mrf.mxu0
      %2117 = vmatprep.mubr.bf16.mxu0 0
      %2118 = vmatmul.mubr.bf16.gmra.mxu0 %v2075
      %v2119 = vpop.f32.mrf.mxu0
      %v2120 = vadd.f32 0.0, %v2119
      %v2121 = vpop.f32.mrf.mxu0
      %v2122 = vpop.f32.mrf.mxu0
      %v2123 = vadd.f32 0.0, %v2122
      %v2124 = vpop.f32.mrf.mxu0
      %2125 = vdwg.mxu0
      %vm2126 = vcmask 122880
      %v2127 = vsel %vm2126, %v215, 0.0
      %2128 = vadd.xlane.f32.xlu0 %v2127
      %v2129 = vpop.xlane.xlu0 %2128
      %v2130 = vmax.f32 %v2129, 1.0
      %v2131 = vlaneseq
      %v2132 = vshrl.u32 %v2131, 7
      %v2133 = vsub.s32 0, %v2132
      %v2134 = vrot.slane %v215, %v2133
      %v2135 = vmul.f32 %v2112, %v2134
      %v2136 = vmul.f32 %v2115, %v2134
      %v2137 = vmul.f32 %v2120, %v2134
      %v2138 = vmul.f32 %v2123, %v2134
      %v2139 = vsel %vm353, %v2135, 0.0
      %2140 = vadd.xlane.f32.xlu0 %v2139
      %v2141 = vpop.xlane.xlu0 %2140
      %v2142 = vsel %vm353, %v2136, 0.0
      %2143 = vadd.xlane.f32.xlu0 %v2142
      %v2144 = vpop.xlane.xlu0 %2143
      %v2145 = vsel %vm353, %v2137, 0.0
      %2146 = vadd.xlane.f32.xlu0 %v2145
      %v2147 = vpop.xlane.xlu0 %2146
      %v2148 = vsel %vm353, %v2138, 0.0
      %2149 = vadd.xlane.f32.xlu0 %v2148
      %v2150 = vpop.xlane.xlu0 %2149
      %v2151 = vrcp.pop %v2130
      %v2152 = vlaneseq
      %v2153 = vshrl.u32 %v2152, 7
      %v2154 = vsub.s32 0, %v2153
      %v2155 = vrot.slane %v2151, %v2154
      %v2156 = vmul.f32 %v2141, %v2155
      %v2157 = vmul.f32 %v2144, %v2155
      %v2158 = vmul.f32 %v2147, %v2155
      %v2159 = vmul.f32 %v2150, %v2155
      %v2160 = vld [vmem:[%s3 + $0x90] sm:$0xf]
      %v2161 = vld [vmem:[%s3 + $0x94] sm:$0xf]
      %v2162 = vpack.c.bf16 %v2157, %v2156
      %v2163 = vpack.c.bf16 %v2159, %v2158
      %v2166 = vunpack.c.l.b16 %v2160
      %v2167 = vunpack.c.l.b16 %v2161
      %v2168 = vpack.c.b16 %v2167, %v2166
      %v2170 = vsel %vm1209, %v2168, 0
      %2172 = vmatprep.subr.bf16.mxu0 0
      %2173 = vmatpush1.bf16.msra.mxu0 0
      %2174 = vmatprep.subr.bf16.mxu0 0
      %2175 = vmatpush1.bf16.msra.mxu0 0
      %2176 = vmatprep.subr.bf16.mxu0 0
      %2177 = vmatpush1.bf16.msra.mxu0 0
      %2178 = vmatprep.subr.bf16.mxu0 0
      %2179 = vmatpush1.bf16.msra.mxu0 0
      %2180 = vmatprep.subr.bf16.mxu0 0
      %2181 = vmatpush1.bf16.msra.mxu0 0
      %2182 = vmatprep.subr.bf16.mxu0 0
      %2183 = vmatpush1.bf16.msra.mxu0 0
      %2184 = vmatprep.subr.bf16.mxu0 0
      %2185 = vmatpush1.bf16.msra.mxu0 %v2163
      %2186 = vmatprep.subr.bf16.mxu0 0
      %2187 = vmatpush1.bf16.msra.mxu0 %v2162
      %2188 = vmatprep.subr.bf16.mxu0 0
      %2189 = vmatpush2.bf16.msra.mxu0 0
      %2190 = vmatprep.subr.bf16.mxu0 0
      %2191 = vmatpush2.bf16.msra.mxu0 0
      %2192 = vmatprep.subr.bf16.mxu0 0
      %2193 = vmatpush2.bf16.msra.mxu0 0
      %2194 = vmatprep.subr.bf16.mxu0 0
      %2195 = vmatpush2.bf16.msra.mxu0 0
      %2196 = vmatprep.subr.bf16.mxu0 0
      %2197 = vmatpush2.bf16.msra.mxu0 0
      %2198 = vmatprep.subr.bf16.mxu0 0
      %2199 = vmatpush2.bf16.msra.mxu0 0
      %2200 = vmatprep.subr.bf16.mxu0 0
      %2201 = vmatpush2.bf16.msra.mxu0 0
      %2202 = vmatprep.subr.bf16.mxu0 0
      %2203 = vmatpush2.bf16.msra.mxu0 0
      %2204 = vmatprep.mubr.bf16.mxu0 0
      %2205 = vmatmul.mubr.bf16.gmra.mxu0 %v2170
      %v2206 = vpop.f32.mrf.mxu0
      %v2207 = vadd.f32 0.0, %v2206
      %v2208 = vpop.f32.mrf.mxu0
      %v2209 = vpop.f32.mrf.mxu0
      %v2210 = vadd.f32 0.0, %v2209
      %v2211 = vpop.f32.mrf.mxu0
      %2212 = vdwg.mxu0
      %v2213 = vmax.f32 %v2207, 0.0
      %v2214 = vmax.f32 %v2210, 0.0
      %v2215 = vld [vmem:[%s3 + $0x98] sm:$0xf]
      %v2216 = vld [vmem:[%s3 + $0x9c] sm:$0xf]
      %v2217 = vld [vmem:[%s3 + $0xa0] sm:$0xf]
      %v2218 = vld [vmem:[%s3 + $0xa4] sm:$0xf]
      %v2219 = vpack.c.bf16 %v2214, %v2213
      %v2224 = vunpack.c.l.b16 %v2215
      %v2225 = vunpack.c.l.b16 %v2216
      %v2226 = vunpack.c.l.b16 %v2217
      %v2227 = vunpack.c.l.b16 %v2218
      %v2228 = vpack.c.b16 %v2225, %v2224
      %v2229 = vpack.c.b16 %v2227, %v2226
      %v2231 = vsel %vm353, %v2228, 0
      %v2234 = vsel %vm353, %v2229, 0
      %2236 = vmatprep.subr.bf16.mxu0 0
      %2237 = vmatpush1.bf16.msra.mxu0 0
      %2238 = vmatprep.subr.bf16.mxu0 0
      %2239 = vmatpush1.bf16.msra.mxu0 0
      %2240 = vmatprep.subr.bf16.mxu0 0
      %2241 = vmatpush1.bf16.msra.mxu0 0
      %2242 = vmatprep.subr.bf16.mxu0 0
      %2243 = vmatpush1.bf16.msra.mxu0 0
      %2244 = vmatprep.subr.bf16.mxu0 0
      %2245 = vmatpush1.bf16.msra.mxu0 0
      %2246 = vmatprep.subr.bf16.mxu0 0
      %2247 = vmatpush1.bf16.msra.mxu0 0
      %2248 = vmatprep.subr.bf16.mxu0 0
      %2249 = vmatpush1.bf16.msra.mxu0 0
      %2250 = vmatprep.subr.bf16.mxu0 0
      %2251 = vmatpush1.bf16.msra.mxu0 %v2219
      %2252 = vmatprep.subr.bf16.mxu0 0
      %2253 = vmatpush2.bf16.msra.mxu0 0
      %2254 = vmatprep.subr.bf16.mxu0 0
      %2255 = vmatpush2.bf16.msra.mxu0 0
      %2256 = vmatprep.subr.bf16.mxu0 0
      %2257 = vmatpush2.bf16.msra.mxu0 0
      %2258 = vmatprep.subr.bf16.mxu0 0
      %2259 = vmatpush2.bf16.msra.mxu0 0
      %2260 = vmatprep.subr.bf16.mxu0 0
      %2261 = vmatpush2.bf16.msra.mxu0 0
      %2262 = vmatprep.subr.bf16.mxu0 0
      %2263 = vmatpush2.bf16.msra.mxu0 0
      %2264 = vmatprep.subr.bf16.mxu0 0
      %2265 = vmatpush2.bf16.msra.mxu0 0
      %2266 = vmatprep.subr.bf16.mxu0 0
      %2267 = vmatpush2.bf16.msra.mxu0 0
      %2268 = vmatprep.mubr.bf16.mxu0 0
      %2269 = vmatmul.mubr.bf16.gmra.mxu0 %v2231
      %v2270 = vpop.f32.mrf.mxu0
      %v2271 = vadd.f32 0.0, %v2270
      %v2272 = vpop.f32.mrf.mxu0
      %v2273 = vpop.f32.mrf.mxu0
      %v2274 = vadd.f32 0.0, %v2273
      %v2275 = vpop.f32.mrf.mxu0
      %2276 = vmatprep.mubr.bf16.mxu0 0
      %2277 = vmatmul.mubr.bf16.gmra.mxu0 %v2234
      %v2278 = vpop.f32.mrf.mxu0
      %v2279 = vadd.f32 0.0, %v2278
      %v2280 = vpop.f32.mrf.mxu0
      %v2281 = vpop.f32.mrf.mxu0
      %v2282 = vadd.f32 0.0, %v2281
      %v2283 = vpop.f32.mrf.mxu0
      %2284 = vdwg.mxu0
      %v2285 = vxor.u32 %v2271, 2147483648
      %v2286 = vxor.u32 %v2274, 2147483648
      %v2287 = vxor.u32 %v2279, 2147483648
      %v2288 = vxor.u32 %v2282, 2147483648
      %v2289 = vmul.f32 %v2285, 1.442695
      %v2290 = vpow.pop %v2289
      %v2291 = vmul.f32 %v2286, 1.442695
      %v2292 = vpow.pop %v2291
      %v2293 = vmul.f32 %v2287, 1.442695
      %v2294 = vpow.pop %v2293
      %v2295 = vmul.f32 %v2288, 1.442695
      %v2296 = vpow.pop %v2295
      %v2297 = vadd.f32 %v2290, 1.0
      %v2298 = vadd.f32 %v2292, 1.0
      %v2299 = vadd.f32 %v2294, 1.0
      %v2300 = vadd.f32 %v2296, 1.0
      %v2301 = vrcp.pop %v2297
      %v2302 = vmul.f32 1.0, %v2301
      %v2303 = vrcp.pop %v2298
      %v2304 = vmul.f32 1.0, %v2303
      %v2305 = vrcp.pop %v2299
      %v2306 = vmul.f32 1.0, %v2305
      %v2307 = vrcp.pop %v2300
      %v2308 = vmul.f32 1.0, %v2307
      %2310 = vset.pattern.permute.xlu0 0
      %2311 = vperm.xlu0 %2310, %v2302
      %v2312 = vpop.permute.xlu0 %2311
      %2315 = vset.pattern.permute.xlu0 0
      %2316 = vperm.xlu0 %2315, %v2304
      %v2317 = vpop.permute.xlu0 %2316
      %2320 = vset.pattern.permute.xlu0 0
      %2321 = vperm.xlu0 %2320, %v2306
      %v2322 = vpop.permute.xlu0 %2321
      %2325 = vset.pattern.permute.xlu0 0
      %2326 = vperm.xlu0 %2325, %v2308
      %v2327 = vpop.permute.xlu0 %2326
      %v2329 = vmul.f32 %v2112, %v2312
      %v2330 = vmul.f32 %v2115, %v2317
      %v2331 = vmul.f32 %v2120, %v2322
      %v2332 = vmul.f32 %v2123, %v2327
      %v2333 = vld [vmem:[%s3 + $0xa8] sm:$0xf]
      %v2334 = vld [vmem:[%s3 + $0xac] sm:$0xf]
      %v2335 = vld [vmem:[%s3 + $0xb0] sm:$0xf]
      %v2336 = vld [vmem:[%s3 + $0xb4] sm:$0xf]
      %v2337 = vpack.c.bf16 %v213, %v213
      %2338 = vset.pattern.permute.xlu0 16
      %2339 = vperm.xlu0 %2338, %v1145
      %v2340 = vpop.permute.xlu0 %2339
      %2342 = vset.pattern.permute.xlu0 16
      %2343 = vperm.xlu0 %2342, %v1146
      %v2344 = vpop.permute.xlu0 %2343
      %2346 = vset.pattern.permute.xlu0 16
      %2347 = vperm.xlu0 %2346, %v1147
      %v2348 = vpop.permute.xlu0 %2347
      %2350 = vset.pattern.permute.xlu0 16
      %2351 = vperm.xlu0 %2350, %v1148
      %v2352 = vpop.permute.xlu0 %2351
      %v2354 = vmul.f32 %v2340, %v2329
      %v2355 = vmul.f32 %v2344, %v2330
      %v2356 = vmul.f32 %v2348, %v2331
      %v2357 = vmul.f32 %v2352, %v2332
      %v2362 = vunpack.c.l.b16 %v2333
      %v2363 = vunpack.c.l.b16 %v2334
      %v2364 = vunpack.c.l.b16 %v2335
      %v2365 = vunpack.c.l.b16 %v2336
      %v2366 = vpack.c.b16 %v2363, %v2362
      %v2367 = vpack.c.b16 %v2365, %v2364
      %v2369 = vsel %vm263, %v2366, 0
      %v2372 = vsel %vm263, %v2367, 0
      %v2375 = vsel %vm267, %v2337, 0
      %2377 = vmatprep.subr.bf16.mxu0 0
      %2378 = vmatpush1.bf16.msra.mxu0 0
      %2379 = vmatprep.subr.bf16.mxu0 0
      %2380 = vmatpush1.bf16.msra.mxu0 0
      %2381 = vmatprep.subr.bf16.mxu0 0
      %2382 = vmatpush1.bf16.msra.mxu0 0
      %2383 = vmatprep.subr.bf16.mxu0 0
      %2384 = vmatpush1.bf16.msra.mxu0 0
      %2385 = vmatprep.subr.bf16.mxu0 0
      %2386 = vmatpush1.bf16.msra.mxu0 0
      %2387 = vmatprep.subr.bf16.mxu0 0
      %2388 = vmatpush1.bf16.msra.mxu0 0
      %2389 = vmatprep.subr.bf16.mxu0 0
      %2390 = vmatpush1.bf16.msra.mxu0 0
      %2391 = vmatprep.subr.bf16.mxu0 0
      %2392 = vmatpush1.bf16.msra.mxu0 %v2375
      %2393 = vmatprep.subr.bf16.mxu0 0
      %2394 = vmatpush2.bf16.msra.mxu0 0
      %2395 = vmatprep.subr.bf16.mxu0 0
      %2396 = vmatpush2.bf16.msra.mxu0 0
      %2397 = vmatprep.subr.bf16.mxu0 0
      %2398 = vmatpush2.bf16.msra.mxu0 0
      %2399 = vmatprep.subr.bf16.mxu0 0
      %2400 = vmatpush2.bf16.msra.mxu0 0
      %2401 = vmatprep.subr.bf16.mxu0 0
      %2402 = vmatpush2.bf16.msra.mxu0 0
      %2403 = vmatprep.subr.bf16.mxu0 0
      %2404 = vmatpush2.bf16.msra.mxu0 0
      %2405 = vmatprep.subr.bf16.mxu0 0
      %2406 = vmatpush2.bf16.msra.mxu0 0
      %2407 = vmatprep.subr.bf16.mxu0 0
      %2408 = vmatpush2.bf16.msra.mxu0 0
      %2409 = vmatprep.mubr.bf16.mxu0 0
      %2410 = vmatmul.mubr.bf16.gmra.mxu0 %v2369
      %v2411 = vpop.f32.mrf.mxu0
      %v2412 = vadd.f32 %v2354, %v2411
      %v2413 = vpop.f32.mrf.mxu0
      %v2414 = vpop.f32.mrf.mxu0
      %v2415 = vadd.f32 %v2355, %v2414
      %v2416 = vpop.f32.mrf.mxu0
      %2417 = vmatprep.mubr.bf16.mxu0 0
      %2418 = vmatmul.mubr.bf16.gmra.mxu0 %v2372
      %v2419 = vpop.f32.mrf.mxu0
      %v2420 = vadd.f32 %v2356, %v2419
      %v2421 = vpop.f32.mrf.mxu0
      %v2422 = vpop.f32.mrf.mxu0
      %v2423 = vadd.f32 %v2357, %v2422
      %v2424 = vpop.f32.mrf.mxu0
      %2425 = vdwg.mxu0
      %2426 = vst.msk [vmem:[%s211] sm:$0xff] %vm353, %v2412
      %2427 = vst.msk [vmem:[%s211 + $0x8] sm:$0xff] %vm353, %v2415
      %2428 = vst.msk [vmem:[%s211 + $0x10] sm:$0xff] %vm353, %v2420
      %2429 = vst.msk [vmem:[%s211 + $0x18] sm:$0xff] %vm353, %v2423
      %p2430 = scmp.lt.s32.totalorder %s15, 1
      %s2431 = scalar_select %p2430, %s15, 1
      %s2432 = smul.addr %s2431, 4
      %s2433 = smul.addr %s2432, 8
      %s2434 = scalar_lea.vmem %s4, %s2433
      // Predicated region
      $region37: #{forward.1} parent=35 // pred_check
        %p2435 = pneg %p127
      $region38: #{forward.1} parent=35 // pred_check_branch
        %2437 = sbr.rel (%p2435) target = $region40
      $region39: #{forward.1} parent=35 // pred_region
        _
      $region40: #{forward.1} parent=35 // pred_fallthru
        _
    $region36: #{forward.1} parent=5 // pred_fallthru
      _
    %p2438 = scmp.le.s32.totalorder 2, %s10
    // Predicated region
    $region41: #{forward.1} parent=5 // pred_check
      %p2439 = pneg %p2438
    $region42: #{forward.1} parent=5 // pred_check_branch
      %2441 = sbr.rel (%p2439) target = $region44
    $region43: #{forward.1} parent=5 // pred_region
      %s2442 = ssub.s32 %s10, 2
      // Predicated region
      $region45: #{forward.1} parent=43 // pred_check
        %p2443 = pneg %p133
      $region46: #{forward.1} parent=43 // pred_check_branch
        %2445 = sbr.rel (%p2443) target = $region48
      $region47: #{forward.1} parent=43 // pred_region
        %p2446 = scmp.lt.s32.totalorder %s16, 1
        %s2447 = scalar_select %p2446, %s16, 1
        %s2448 = smul.addr %s2447, 4
        %s2449 = smul.addr %s2448, 8
        %s2450 = scalar_lea.vmem %s4, %s2449
      $region48: #{forward.1} parent=43 // pred_fallthru
        _
    $region44: #{forward.1} parent=5 // pred_fallthru
      _
  $region6: #{forward.1} parent=0 // loop_footer
    %s14 = sadd.s32 1, %s10
  $region7: #{forward.1} parent=0 // loop_footer_branch
    %9 = sbr.rel target = $region3
  $region8: #{forward.1} parent=0 // loop_exit
    _

</llo_original>
